<compile_context>
chip_gen: v6e
topology: v6e:2x2x1
jax: 0.10.0
libtpu: 0.0.40
codegen_flags: <defaults>
</compile_context>

<pallas_src>
from functools import partial

import numpy as np
import jax
import jax.numpy as jnp
from jax.experimental import pallas as pl
from jax.experimental.pallas import tpu as pltpu

_PAD = 128  # lane halo on each side of the flattened spatial axis (zero pad)


# ----------------------------------------------------------------------------
# In-kernel helpers
# ----------------------------------------------------------------------------
def _col_index(hw, w):
    """x-coordinate of each flattened spatial position, shape (1, hw)."""
    lane = jax.lax.broadcasted_iota(jnp.int32, (1, hw), 1)
    return jnp.bitwise_and(lane, w - 1)  # w is a power of two (asserted below)


def _conv3x3_from_canvas(canvas_ref, w_ref, b_ref, *, w, hw, col, relu):
    """3x3 same-padded conv as ONE im2col matmul on the MXU.

    canvas_ref : (cin, 2*_PAD + hw) f32 VMEM ref. Real data in [_PAD, _PAD+hw),
                 zeros elsewhere (serves as the conv zero-padding halo).
    w_ref      : (cout, 9*cin) bf16   (= w.reshape(9*cin, cout).T)
    b_ref      : (cout, 1)     f32
    """
    m_prev = col > 0          # reading x-1 is invalid on the first column
    m_next = col < (w - 1)    # reading x+1 is invalid on the last column
    taps = []
    for ky in range(3):
        for kx in range(3):
            s = (ky - 1) * w + (kx - 1)
            t = canvas_ref[:, pl.ds(_PAD + s, hw)]       # zero-filled row shift
            if kx == 0:
                t = jnp.where(m_prev, t, 0.0)
            elif kx == 2:
                t = jnp.where(m_next, t, 0.0)
            taps.append(t)
    patches = jnp.concatenate(taps, axis=0).astype(jnp.bfloat16)   # (9*cin, hw)
    out = jnp.dot(w_ref[...], patches, preferred_element_type=jnp.float32)
    out = out + b_ref[...]
    if relu:
        out = jnp.maximum(out, 0.0)
    return out                                                     # (cout, hw)


# ----------------------------------------------------------------------------
# One fused kernel: whole U-Net forward for a single image
# ----------------------------------------------------------------------------
def _fused_unet_kernel(x_ref, e1w_ref, e1b_ref, e2w_ref, e2b_ref, pool_ref,
                       bw_ref, bb_ref, up_ref, dw_ref, db_ref, hw_ref, hb_ref,
                       o_ref,
                       cx_ref, ce1_ref, ccat_ref, cp_ref,
                       *, H, W, base):
    HW = H * W
    Hp, Wp = H // 2, W // 2
    HWp = Hp * Wp

    # Zero the canvases so the halo regions read back as zeros.
    cx_ref[...] = jnp.zeros_like(cx_ref)
    ce1_ref[...] = jnp.zeros_like(ce1_ref)
    ccat_ref[...] = jnp.zeros_like(ccat_ref)
    cp_ref[...] = jnp.zeros_like(cp_ref)

    col_f = _col_index(HW, W)
    col_p = _col_index(HWp, Wp)

    # ---------------- encoder ----------------
    cx_ref[:, pl.ds(_PAD, HW)] = x_ref[0]
    e1 = _conv3x3_from_canvas(cx_ref, e1w_ref, e1b_ref,
                              w=W, hw=HW, col=col_f, relu=True)
    ce1_ref[:, pl.ds(_PAD, HW)] = e1
    e2 = _conv3x3_from_canvas(ce1_ref, e2w_ref, e2b_ref,
                              w=W, hw=HW, col=col_f, relu=True)
    # e2 doubles as the skip connection: park it in the bottom rows of the
    # decoder-input canvas.
    ccat_ref[2 * base:3 * base, pl.ds(_PAD, HW)] = e2

    # ------- 2x2 max-pool fused into the e2 epilogue -------
    # Max over the 2x2 window via shifted reads of the e2 canvas, then compact
    # the (even, even) positions with a one-hot selection matmul (lane-dense).
    t01 = ccat_ref[2 * base:3 * base, pl.ds(_PAD + 1, HW)]
    t10 = ccat_ref[2 * base:3 * base, pl.ds(_PAD + W, HW)]
    t11 = ccat_ref[2 * base:3 * base, pl.ds(_PAD + W + 1, HW)]
    mx = jnp.maximum(jnp.maximum(e2, t01), jnp.maximum(t10, t11))   # (base, HW)
    pooled = jnp.dot(mx.astype(jnp.bfloat16), pool_ref[...],
                     preferred_element_type=jnp.float32)            # (base, HWp)
    cp_ref[:, pl.ds(_PAD, HWp)] = pooled

    # ---------------- bottleneck ----------------
    bt = _conv3x3_from_canvas(cp_ref, bw_ref, bb_ref,
                              w=Wp, hw=HWp, col=col_p, relu=True)   # (2*base, HWp)

    # ------- nearest 2x upsample (one-hot matmul) + skip concat -------
    up = jnp.dot(bt.astype(jnp.bfloat16), up_ref[...],
                 preferred_element_type=jnp.float32)                # (2*base, HW)
    ccat_ref[0:2 * base, pl.ds(_PAD, HW)] = up

    # ---------------- decoder ----------------
    d = _conv3x3_from_canvas(ccat_ref, dw_ref, db_ref,
                             w=W, hw=HW, col=col_f, relu=True)      # (base, HW)

    # ---------------- 1x1 head + sigmoid ----------------
    logits = jnp.dot(hw_ref[...], d.astype(jnp.bfloat16),
                     preferred_element_type=jnp.float32) + hb_ref[...]
    o_ref[0] = jax.nn.sigmoid(logits)                               # (ncls, HW)


# ----------------------------------------------------------------------------
# Wrapper-side constant prep (weights flattened for im2col, one-hot matrices)
# ----------------------------------------------------------------------------
def _flatten_conv_weight(w, cin_pad=None):
    kh, kw, cin, cout = w.shape
    if cin_pad is not None and cin_pad != cin:
        w = jnp.pad(w, ((0, 0), (0, 0), (0, cin_pad - cin), (0, 0)))
        cin = cin_pad
    return jnp.transpose(w.reshape(kh * kw * cin, cout)).astype(jnp.bfloat16)


def _pool_select_matrix(H, W):
    Hp, Wp = H // 2, W // 2
    S = np.zeros((H * W, Hp * Wp), np.float32)
    for py in range(Hp):
        for px in range(Wp):
            S[2 * py * W + 2 * px, py * Wp + px] = 1.0
    return jnp.asarray(S, jnp.bfloat16)


def _upsample_matrix(H, W):
    Hp, Wp = H // 2, W // 2
    U = np.zeros((Hp * Wp, H * W), np.float32)
    for y in range(H):
        for x in range(W):
            U[(y // 2) * Wp + (x // 2), y * W + x] = 1.0
    return jnp.asarray(U, jnp.bfloat16)


def layout_segmentation_forward(x_nchw, params, *, base=8, num_classes=1):
    """x_nchw: (N, 3, H, W) float32 -> (N, num_classes, H, W) sigmoid probs."""
    N, cin, H, W = x_nchw.shape
    assert H % 2 == 0 and W % 2 == 0
    # TODO(synk): the in-kernel column masks use `lane & (W-1)`; general
    # (non power-of-two) widths would need an integer modulo instead.
    assert W & (W - 1) == 0 and (W // 2) & ((W // 2) - 1) == 0
    HW, HWp = H * W, (H // 2) * (W // 2)
    assert HW % 128 == 0, "flattened spatial axis must be lane-aligned"

    cin_pad = base  # pad 3 input channels to a full sublane group of 8
    x2 = x_nchw.reshape(N, cin, HW).astype(jnp.float32)
    x2 = jnp.pad(x2, ((0, 0), (0, cin_pad - cin), (0, 0)))

    args = (
        x2,
        _flatten_conv_weight(params["e1_w"], cin_pad),                 # (base, 9*base)
        params["e1_b"].reshape(base, 1).astype(jnp.float32),
        _flatten_conv_weight(params["e2_w"]),                          # (base, 9*base)
        params["e2_b"].reshape(base, 1).astype(jnp.float32),
        _pool_select_matrix(H, W),                                     # (HW, HWp)
        _flatten_conv_weight(params["b_w"]),                           # (2b, 9*base)
        params["b_b"].reshape(2 * base, 1).astype(jnp.float32),
        _upsample_matrix(H, W),                                        # (HWp, HW)
        _flatten_conv_weight(params["d_w"]),                           # (base, 27*base)
        params["d_b"].reshape(base, 1).astype(jnp.float32),
        jnp.transpose(params["h_w"]).astype(jnp.bfloat16),             # (ncls, base)
        params["h_b"].reshape(num_classes, 1).astype(jnp.float32),
    )

    in_specs = [pl.BlockSpec((1, cin_pad, HW), lambda n: (n, 0, 0))]
    in_specs += [pl.BlockSpec(a.shape, lambda n: (0, 0)) for a in args[1:]]

    kernel = partial(_fused_unet_kernel, H=H, W=W, base=base)
    # TODO(synk): for large H, W (e.g. 512x512) add a row-tiled grid axis with
    # a halo so the canvases fit v7x's 64 MiB VMEM and both v7x TensorCores
    # stay busy at N=1; at 16x16 one image fits trivially in VMEM.
    out = pl.pallas_call(
        kernel,
        out_shape=jax.ShapeDtypeStruct((N, num_classes, HW), jnp.float32),
        grid=(N,),
        in_specs=in_specs,
        out_specs=pl.BlockSpec((1, num_classes, HW), lambda n: (n, 0, 0)),
        scratch_shapes=[
            pltpu.VMEM((cin_pad, HW + 2 * _PAD), jnp.float32),    # x canvas
            pltpu.VMEM((base, HW + 2 * _PAD), jnp.float32),       # e1 canvas
            pltpu.VMEM((3 * base, HW + 2 * _PAD), jnp.float32),   # [up ; e2]
            pltpu.VMEM((base, HWp + 2 * _PAD), jnp.float32),      # pooled
        ],
        compiler_params=pltpu.CompilerParams(
            dimension_semantics=("parallel",)),
    )(*args)
    return out.reshape(N, num_classes, H, W)


# ----------------------------------------------------------------------------
# Parameters (compact U-Net: encoder -> pool -> bottleneck -> decoder -> head)
# ----------------------------------------------------------------------------
def init_params(seed=42, in_ch=3, base=8, num_classes=1):
    key = jax.random.PRNGKey(seed)
    ks = jax.random.split(key, 5)

    def conv_w(k, kh, kw, cin, cout):
        std = (2.0 / (kh * kw * cin)) ** 0.5
        return jax.random.normal(k, (kh, kw, cin, cout), jnp.float32) * std

    return {
        "e1_w": conv_w(ks[0], 3, 3, in_ch, base),
        "e1_b": jnp.zeros((base,), jnp.float32),
        "e2_w": conv_w(ks[1], 3, 3, base, base),
        "e2_b": jnp.zeros((base,), jnp.float32),
        "b_w": conv_w(ks[2], 3, 3, base, 2 * base),
        "b_b": jnp.zeros((2 * base,), jnp.float32),
        "d_w": conv_w(ks[3], 3, 3, 3 * base, base),
        "d_b": jnp.zeros((base,), jnp.float32),
        "h_w": jax.random.normal(ks[4], (base, num_classes), jnp.float32)
               * (1.0 / base) ** 0.5,
        "h_b": jnp.zeros((num_classes,), jnp.float32),
    }


if __name__ == "__main__":
    key = jax.random.PRNGKey(0)
    x = jax.random.normal(key, (2, 3, 16, 16), jnp.float32)   # NCHW input
    params = init_params()

    fwd = jax.jit(layout_segmentation_forward)
    out = jax.block_until_ready(fwd(x, params))

    assert out.shape == (2, 1, 16, 16), out.shape
    assert bool(jnp.all((out >= 0.0) & (out <= 1.0)))
    print("KERNEL_OK")
</pallas_src>

<mosaic_0001>
module attributes {stable_mosaic.version = 11 : i64} {
  func.func @_fused_unet_kernel(%arg0: i32, %arg1: memref<1x8x256xf32, #tpu.memory_space<vmem>>, %arg2: memref<8x72xbf16, #tpu.memory_space<vmem>>, %arg3: memref<8x1xf32, #tpu.memory_space<vmem>>, %arg4: memref<8x72xbf16, #tpu.memory_space<vmem>>, %arg5: memref<8x1xf32, #tpu.memory_space<vmem>>, %arg6: memref<256x64xbf16, #tpu.memory_space<vmem>>, %arg7: memref<16x72xbf16, #tpu.memory_space<vmem>>, %arg8: memref<16x1xf32, #tpu.memory_space<vmem>>, %arg9: memref<64x256xbf16, #tpu.memory_space<vmem>>, %arg10: memref<8x216xbf16, #tpu.memory_space<vmem>>, %arg11: memref<8x1xf32, #tpu.memory_space<vmem>>, %arg12: memref<1x8xbf16, #tpu.memory_space<vmem>>, %arg13: memref<1x1xf32, #tpu.memory_space<vmem>>, %arg14: memref<1x1x256xf32, #tpu.memory_space<vmem>>, %arg15: memref<8x512xf32, #tpu.memory_space<vmem>>, %arg16: memref<8x512xf32, #tpu.memory_space<vmem>>, %arg17: memref<24x512xf32, #tpu.memory_space<vmem>>, %arg18: memref<8x320xf32, #tpu.memory_space<vmem>>) attributes {dimension_semantics = [#tpu.dimension_semantics<parallel>], iteration_bounds = array<i64: 2>, scalar_prefetch = 0 : i64, scratch_operands = 4 : i64, tpu.core_type = #tpu.core_type<tc>, window_params = [{transform_indices = @transform_0, window_bounds = array<i64: 1, 8, 256>}, {pipeline_mode = #tpu.pipeline_mode<synchronous>, transform_indices = @transform_1, window_bounds = array<i64: 8, 72>}, {pipeline_mode = #tpu.pipeline_mode<synchronous>, transform_indices = @transform_2, window_bounds = array<i64: 8, 1>}, {pipeline_mode = #tpu.pipeline_mode<synchronous>, transform_indices = @transform_3, window_bounds = array<i64: 8, 72>}, {pipeline_mode = #tpu.pipeline_mode<synchronous>, transform_indices = @transform_4, window_bounds = array<i64: 8, 1>}, {pipeline_mode = #tpu.pipeline_mode<synchronous>, transform_indices = @transform_5, window_bounds = array<i64: 256, 64>}, {pipeline_mode = #tpu.pipeline_mode<synchronous>, transform_indices = @transform_6, window_bounds = array<i64: 16, 72>}, {pipeline_mode = #tpu.pipeline_mode<synchronous>, transform_indices = @transform_7, window_bounds = array<i64: 16, 1>}, {pipeline_mode = #tpu.pipeline_mode<synchronous>, transform_indices = @transform_8, window_bounds = array<i64: 64, 256>}, {pipeline_mode = #tpu.pipeline_mode<synchronous>, transform_indices = @transform_9, window_bounds = array<i64: 8, 216>}, {pipeline_mode = #tpu.pipeline_mode<synchronous>, transform_indices = @transform_10, window_bounds = array<i64: 8, 1>}, {pipeline_mode = #tpu.pipeline_mode<synchronous>, transform_indices = @transform_11, window_bounds = array<i64: 1, 8>}, {pipeline_mode = #tpu.pipeline_mode<synchronous>, transform_indices = @transform_12, window_bounds = array<i64: 1, 1>}, {transform_indices = @transform_13, window_bounds = array<i64: 1, 1, 256>}]} {
    %cst = arith.constant 0.000000e+00 : f32
    %0 = vector.broadcast %cst : f32 to vector<8x512xf32>
    %c0 = arith.constant 0 : index
    %c0_0 = arith.constant 0 : index
    %1 = vector.load %arg15[%c0, %c0_0] : memref<8x512xf32, #tpu.memory_space<vmem>>, vector<8x512xf32>
    tpu.vector_store %arg15[%c0, %c0_0], %0 {strides = array<i32>} : memref<8x512xf32, #tpu.memory_space<vmem>>, vector<8x512xf32>,
    %cst_1 = arith.constant 0.000000e+00 : f32
    %2 = vector.broadcast %cst_1 : f32 to vector<8x512xf32>
    %c0_2 = arith.constant 0 : index
    %c0_3 = arith.constant 0 : index
    %3 = vector.load %arg16[%c0_2, %c0_3] : memref<8x512xf32, #tpu.memory_space<vmem>>, vector<8x512xf32>
    tpu.vector_store %arg16[%c0_2, %c0_3], %2 {strides = array<i32>} : memref<8x512xf32, #tpu.memory_space<vmem>>, vector<8x512xf32>,
    %cst_4 = arith.constant 0.000000e+00 : f32
    %4 = vector.broadcast %cst_4 : f32 to vector<24x512xf32>
    %c0_5 = arith.constant 0 : index
    %c0_6 = arith.constant 0 : index
    %5 = vector.load %arg17[%c0_5, %c0_6] : memref<24x512xf32, #tpu.memory_space<vmem>>, vector<24x512xf32>
    tpu.vector_store %arg17[%c0_5, %c0_6], %4 {strides = array<i32>} : memref<24x512xf32, #tpu.memory_space<vmem>>, vector<24x512xf32>,
    %cst_7 = arith.constant 0.000000e+00 : f32
    %6 = vector.broadcast %cst_7 : f32 to vector<8x320xf32>
    %c0_8 = arith.constant 0 : index
    %c0_9 = arith.constant 0 : index
    %7 = vector.load %arg18[%c0_8, %c0_9] : memref<8x320xf32, #tpu.memory_space<vmem>>, vector<8x320xf32>
    tpu.vector_store %arg18[%c0_8, %c0_9], %6 {strides = array<i32>} : memref<8x320xf32, #tpu.memory_space<vmem>>, vector<8x320xf32>,
    %8 = tpu.iota {dimensions = array<i32: 1>} : vector<1x256xi32>
    %c15_i32 = arith.constant 15 : i32
    %9 = vector.broadcast %c15_i32 : i32 to vector<1x256xi32>
    %10 = arith.andi %8, %9 : vector<1x256xi32>
    %11 = tpu.iota {dimensions = array<i32: 1>} : vector<1x64xi32>
    %c7_i32 = arith.constant 7 : i32
    %12 = vector.broadcast %c7_i32 : i32 to vector<1x64xi32>
    %13 = arith.andi %11, %12 : vector<1x64xi32>
    %c0_10 = arith.constant 0 : index
    %c0_11 = arith.constant 0 : index
    %c0_12 = arith.constant 0 : index
    %14 = vector.load %arg1[%c0_10, %c0_11, %c0_12] : memref<1x8x256xf32, #tpu.memory_space<vmem>>, vector<1x8x256xf32>
    %15 = vector.shape_cast %14 : vector<1x8x256xf32> to vector<8x256xf32>
    %c0_13 = arith.constant 0 : index
    %c128 = arith.constant 128 : index
    %16 = vector.load %arg15[%c0_13, %c128] : memref<8x512xf32, #tpu.memory_space<vmem>>, vector<8x256xf32>
    tpu.vector_store %arg15[%c0_13, %c128], %15 {strides = array<i32>} : memref<8x512xf32, #tpu.memory_space<vmem>>, vector<8x256xf32>,
    %c0_i32 = arith.constant 0 : i32
    %17 = vector.broadcast %c0_i32 : i32 to vector<1x256xi32>
    %18 = arith.cmpi sgt, %10, %17 : vector<1x256xi32>
    %c15_i32_14 = arith.constant 15 : i32
    %19 = vector.broadcast %c15_i32_14 : i32 to vector<1x256xi32>
    %20 = arith.cmpi slt, %10, %19 : vector<1x256xi32>
    %c0_15 = arith.constant 0 : index
    %c111 = arith.constant 111 : index
    %21 = vector.load %arg15[%c0_15, %c111] : memref<8x512xf32, #tpu.memory_space<vmem>>, vector<8x256xf32>
    %cst_16 = arith.constant 0.000000e+00 : f32
    %22 = vector.shape_cast %18 : vector<1x256xi1> to vector<1x256xi1>
    %23 = vector.broadcast %22 : vector<1x256xi1> to vector<8x256xi1>
    %24 = vector.broadcast %cst_16 : f32 to vector<8x256xf32>
    %25 = arith.select %23, %21, %24 : vector<8x256xi1>, vector<8x256xf32>
    %c0_17 = arith.constant 0 : index
    %c112 = arith.constant 112 : index
    %26 = vector.load %arg15[%c0_17, %c112] : memref<8x512xf32, #tpu.memory_space<vmem>>, vector<8x256xf32>
    %c0_18 = arith.constant 0 : index
    %c113 = arith.constant 113 : index
    %27 = vector.load %arg15[%c0_18, %c113] : memref<8x512xf32, #tpu.memory_space<vmem>>, vector<8x256xf32>
    %cst_19 = arith.constant 0.000000e+00 : f32
    %28 = vector.shape_cast %20 : vector<1x256xi1> to vector<1x256xi1>
    %29 = vector.broadcast %28 : vector<1x256xi1> to vector<8x256xi1>
    %30 = vector.broadcast %cst_19 : f32 to vector<8x256xf32>
    %31 = arith.select %29, %27, %30 : vector<8x256xi1>, vector<8x256xf32>
    %c0_20 = arith.constant 0 : index
    %c127 = arith.constant 127 : index
    %32 = vector.load %arg15[%c0_20, %c127] : memref<8x512xf32, #tpu.memory_space<vmem>>, vector<8x256xf32>
    %cst_21 = arith.constant 0.000000e+00 : f32
    %33 = vector.shape_cast %18 : vector<1x256xi1> to vector<1x256xi1>
    %34 = vector.broadcast %33 : vector<1x256xi1> to vector<8x256xi1>
    %35 = vector.broadcast %cst_21 : f32 to vector<8x256xf32>
    %36 = arith.select %34, %32, %35 : vector<8x256xi1>, vector<8x256xf32>
    %c0_22 = arith.constant 0 : index
    %c128_23 = arith.constant 128 : index
    %37 = vector.load %arg15[%c0_22, %c128_23] : memref<8x512xf32, #tpu.memory_space<vmem>>, vector<8x256xf32>
    %c0_24 = arith.constant 0 : index
    %c129 = arith.constant 129 : index
    %38 = vector.load %arg15[%c0_24, %c129] : memref<8x512xf32, #tpu.memory_space<vmem>>, vector<8x256xf32>
    %cst_25 = arith.constant 0.000000e+00 : f32
    %39 = vector.shape_cast %20 : vector<1x256xi1> to vector<1x256xi1>
    %40 = vector.broadcast %39 : vector<1x256xi1> to vector<8x256xi1>
    %41 = vector.broadcast %cst_25 : f32 to vector<8x256xf32>
    %42 = arith.select %40, %38, %41 : vector<8x256xi1>, vector<8x256xf32>
    %c0_26 = arith.constant 0 : index
    %c143 = arith.constant 143 : index
    %43 = vector.load %arg15[%c0_26, %c143] : memref<8x512xf32, #tpu.memory_space<vmem>>, vector<8x256xf32>
    %cst_27 = arith.constant 0.000000e+00 : f32
    %44 = vector.shape_cast %18 : vector<1x256xi1> to vector<1x256xi1>
    %45 = vector.broadcast %44 : vector<1x256xi1> to vector<8x256xi1>
    %46 = vector.broadcast %cst_27 : f32 to vector<8x256xf32>
    %47 = arith.select %45, %43, %46 : vector<8x256xi1>, vector<8x256xf32>
    %c0_28 = arith.constant 0 : index
    %c144 = arith.constant 144 : index
    %48 = vector.load %arg15[%c0_28, %c144] : memref<8x512xf32, #tpu.memory_space<vmem>>, vector<8x256xf32>
    %c0_29 = arith.constant 0 : index
    %c145 = arith.constant 145 : index
    %49 = vector.load %arg15[%c0_29, %c145] : memref<8x512xf32, #tpu.memory_space<vmem>>, vector<8x256xf32>
    %cst_30 = arith.constant 0.000000e+00 : f32
    %50 = vector.shape_cast %20 : vector<1x256xi1> to vector<1x256xi1>
    %51 = vector.broadcast %50 : vector<1x256xi1> to vector<8x256xi1>
    %52 = vector.broadcast %cst_30 : f32 to vector<8x256xf32>
    %53 = arith.select %51, %49, %52 : vector<8x256xi1>, vector<8x256xf32>
    %54 = tpu.concatenate %25, %26, %31, %36, %37, %42, %47, %48, %53 in 0 : vector<8x256xf32>, vector<8x256xf32>, vector<8x256xf32>, vector<8x256xf32>, vector<8x256xf32>, vector<8x256xf32>, vector<8x256xf32>, vector<8x256xf32>, vector<8x256xf32> -> vector<72x256xf32>
    %55 = arith.truncf %54 : vector<72x256xf32> to vector<72x256xbf16>
    %c0_31 = arith.constant 0 : index
    %c0_32 = arith.constant 0 : index
    %56 = vector.load %arg2[%c0_31, %c0_32] : memref<8x72xbf16, #tpu.memory_space<vmem>>, vector<8x72xbf16>
    %cst_33 = arith.constant dense<0.000000e+00> : vector<8x256xf32>
    %57 = tpu.matmul %56, %55, %cst_33 {dimension_numbers = #tpu.dot_dimension_numbers<[1], [0], [0], [1], [0, 0, 1, 1], [], []>} : vector<8x72xbf16>, vector<72x256xbf16>, vector<8x256xf32> -> vector<8x256xf32>
    %c0_34 = arith.constant 0 : index
    %c0_35 = arith.constant 0 : index
    %58 = vector.load %arg3[%c0_34, %c0_35] : memref<8x1xf32, #tpu.memory_space<vmem>>, vector<8x1xf32>
    %59 = vector.broadcast %58 : vector<8x1xf32> to vector<8x256xf32>
    %60 = arith.addf %57, %59 : vector<8x256xf32>
    %cst_36 = arith.constant 0.000000e+00 : f32
    %61 = vector.broadcast %cst_36 : f32 to vector<8x256xf32>
    %62 = arith.maximumf %60, %61 : vector<8x256xf32>
    %c0_37 = arith.constant 0 : index
    %c128_38 = arith.constant 128 : index
    %63 = vector.load %arg16[%c0_37, %c128_38] : memref<8x512xf32, #tpu.memory_space<vmem>>, vector<8x256xf32>
    tpu.vector_store %arg16[%c0_37, %c128_38], %62 {strides = array<i32>} : memref<8x512xf32, #tpu.memory_space<vmem>>, vector<8x256xf32>,
    %c0_i32_39 = arith.constant 0 : i32
    %64 = vector.broadcast %c0_i32_39 : i32 to vector<1x256xi32>
    %65 = arith.cmpi sgt, %10, %64 : vector<1x256xi32>
    %c15_i32_40 = arith.constant 15 : i32
    %66 = vector.broadcast %c15_i32_40 : i32 to vector<1x256xi32>
    %67 = arith.cmpi slt, %10, %66 : vector<1x256xi32>
    %c0_41 = arith.constant 0 : index
    %c111_42 = arith.constant 111 : index
    %68 = vector.load %arg16[%c0_41, %c111_42] : memref<8x512xf32, #tpu.memory_space<vmem>>, vector<8x256xf32>
    %cst_43 = arith.constant 0.000000e+00 : f32
    %69 = vector.shape_cast %65 : vector<1x256xi1> to vector<1x256xi1>
    %70 = vector.broadcast %69 : vector<1x256xi1> to vector<8x256xi1>
    %71 = vector.broadcast %cst_43 : f32 to vector<8x256xf32>
    %72 = arith.select %70, %68, %71 : vector<8x256xi1>, vector<8x256xf32>
    %c0_44 = arith.constant 0 : index
    %c112_45 = arith.constant 112 : index
    %73 = vector.load %arg16[%c0_44, %c112_45] : memref<8x512xf32, #tpu.memory_space<vmem>>, vector<8x256xf32>
    %c0_46 = arith.constant 0 : index
    %c113_47 = arith.constant 113 : index
    %74 = vector.load %arg16[%c0_46, %c113_47] : memref<8x512xf32, #tpu.memory_space<vmem>>, vector<8x256xf32>
    %cst_48 = arith.constant 0.000000e+00 : f32
    %75 = vector.shape_cast %67 : vector<1x256xi1> to vector<1x256xi1>
    %76 = vector.broadcast %75 : vector<1x256xi1> to vector<8x256xi1>
    %77 = vector.broadcast %cst_48 : f32 to vector<8x256xf32>
    %78 = arith.select %76, %74, %77 : vector<8x256xi1>, vector<8x256xf32>
    %c0_49 = arith.constant 0 : index
    %c127_50 = arith.constant 127 : index
    %79 = vector.load %arg16[%c0_49, %c127_50] : memref<8x512xf32, #tpu.memory_space<vmem>>, vector<8x256xf32>
    %cst_51 = arith.constant 0.000000e+00 : f32
    %80 = vector.shape_cast %65 : vector<1x256xi1> to vector<1x256xi1>
    %81 = vector.broadcast %80 : vector<1x256xi1> to vector<8x256xi1>
    %82 = vector.broadcast %cst_51 : f32 to vector<8x256xf32>
    %83 = arith.select %81, %79, %82 : vector<8x256xi1>, vector<8x256xf32>
    %c0_52 = arith.constant 0 : index
    %c128_53 = arith.constant 128 : index
    %84 = vector.load %arg16[%c0_52, %c128_53] : memref<8x512xf32, #tpu.memory_space<vmem>>, vector<8x256xf32>
    %c0_54 = arith.constant 0 : index
    %c129_55 = arith.constant 129 : index
    %85 = vector.load %arg16[%c0_54, %c129_55] : memref<8x512xf32, #tpu.memory_space<vmem>>, vector<8x256xf32>
    %cst_56 = arith.constant 0.000000e+00 : f32
    %86 = vector.shape_cast %67 : vector<1x256xi1> to vector<1x256xi1>
    %87 = vector.broadcast %86 : vector<1x256xi1> to vector<8x256xi1>
    %88 = vector.broadcast %cst_56 : f32 to vector<8x256xf32>
    %89 = arith.select %87, %85, %88 : vector<8x256xi1>, vector<8x256xf32>
    %c0_57 = arith.constant 0 : index
    %c143_58 = arith.constant 143 : index
    %90 = vector.load %arg16[%c0_57, %c143_58] : memref<8x512xf32, #tpu.memory_space<vmem>>, vector<8x256xf32>
    %cst_59 = arith.constant 0.000000e+00 : f32
    %91 = vector.shape_cast %65 : vector<1x256xi1> to vector<1x256xi1>
    %92 = vector.broadcast %91 : vector<1x256xi1> to vector<8x256xi1>
    %93 = vector.broadcast %cst_59 : f32 to vector<8x256xf32>
    %94 = arith.select %92, %90, %93 : vector<8x256xi1>, vector<8x256xf32>
    %c0_60 = arith.constant 0 : index
    %c144_61 = arith.constant 144 : index
    %95 = vector.load %arg16[%c0_60, %c144_61] : memref<8x512xf32, #tpu.memory_space<vmem>>, vector<8x256xf32>
    %c0_62 = arith.constant 0 : index
    %c145_63 = arith.constant 145 : index
    %96 = vector.load %arg16[%c0_62, %c145_63] : memref<8x512xf32, #tpu.memory_space<vmem>>, vector<8x256xf32>
    %cst_64 = arith.constant 0.000000e+00 : f32
    %97 = vector.shape_cast %67 : vector<1x256xi1> to vector<1x256xi1>
    %98 = vector.broadcast %97 : vector<1x256xi1> to vector<8x256xi1>
    %99 = vector.broadcast %cst_64 : f32 to vector<8x256xf32>
    %100 = arith.select %98, %96, %99 : vector<8x256xi1>, vector<8x256xf32>
    %101 = tpu.concatenate %72, %73, %78, %83, %84, %89, %94, %95, %100 in 0 : vector<8x256xf32>, vector<8x256xf32>, vector<8x256xf32>, vector<8x256xf32>, vector<8x256xf32>, vector<8x256xf32>, vector<8x256xf32>, vector<8x256xf32>, vector<8x256xf32> -> vector<72x256xf32>
    %102 = arith.truncf %101 : vector<72x256xf32> to vector<72x256xbf16>
    %c0_65 = arith.constant 0 : index
    %c0_66 = arith.constant 0 : index
    %103 = vector.load %arg4[%c0_65, %c0_66] : memref<8x72xbf16, #tpu.memory_space<vmem>>, vector<8x72xbf16>
    %cst_67 = arith.constant dense<0.000000e+00> : vector<8x256xf32>
    %104 = tpu.matmul %103, %102, %cst_67 {dimension_numbers = #tpu.dot_dimension_numbers<[1], [0], [0], [1], [0, 0, 1, 1], [], []>} : vector<8x72xbf16>, vector<72x256xbf16>, vector<8x256xf32> -> vector<8x256xf32>
    %c0_68 = arith.constant 0 : index
    %c0_69 = arith.constant 0 : index
    %105 = vector.load %arg5[%c0_68, %c0_69] : memref<8x1xf32, #tpu.memory_space<vmem>>, vector<8x1xf32>
    %106 = vector.broadcast %105 : vector<8x1xf32> to vector<8x256xf32>
    %107 = arith.addf %104, %106 : vector<8x256xf32>
    %cst_70 = arith.constant 0.000000e+00 : f32
    %108 = vector.broadcast %cst_70 : f32 to vector<8x256xf32>
    %109 = arith.maximumf %107, %108 : vector<8x256xf32>
    %c16 = arith.constant 16 : index
    %c128_71 = arith.constant 128 : index
    %110 = vector.load %arg17[%c16, %c128_71] : memref<24x512xf32, #tpu.memory_space<vmem>>, vector<8x256xf32>
    tpu.vector_store %arg17[%c16, %c128_71], %109 {strides = array<i32>} : memref<24x512xf32, #tpu.memory_space<vmem>>, vector<8x256xf32>,
    %c16_72 = arith.constant 16 : index
    %c129_73 = arith.constant 129 : index
    %111 = vector.load %arg17[%c16_72, %c129_73] : memref<24x512xf32, #tpu.memory_space<vmem>>, vector<8x256xf32>
    %c16_74 = arith.constant 16 : index
    %c144_75 = arith.constant 144 : index
    %112 = vector.load %arg17[%c16_74, %c144_75] : memref<24x512xf32, #tpu.memory_space<vmem>>, vector<8x256xf32>
    %c16_76 = arith.constant 16 : index
    %c145_77 = arith.constant 145 : index
    %113 = vector.load %arg17[%c16_76, %c145_77] : memref<24x512xf32, #tpu.memory_space<vmem>>, vector<8x256xf32>
    %114 = arith.maximumf %109, %111 : vector<8x256xf32>
    %115 = arith.maximumf %112, %113 : vector<8x256xf32>
    %116 = arith.maximumf %114, %115 : vector<8x256xf32>
    %117 = arith.truncf %116 : vector<8x256xf32> to vector<8x256xbf16>
    %c0_78 = arith.constant 0 : index
    %c0_79 = arith.constant 0 : index
    %118 = vector.load %arg6[%c0_78, %c0_79] : memref<256x64xbf16, #tpu.memory_space<vmem>>, vector<256x64xbf16>
    %cst_80 = arith.constant dense<0.000000e+00> : vector<8x64xf32>
    %119 = tpu.matmul %117, %118, %cst_80 {dimension_numbers = #tpu.dot_dimension_numbers<[1], [0], [0], [1], [0, 0, 1, 1], [], []>} : vector<8x256xbf16>, vector<256x64xbf16>, vector<8x64xf32> -> vector<8x64xf32>
    %c0_81 = arith.constant 0 : index
    %c128_82 = arith.constant 128 : index
    %120 = vector.load %arg18[%c0_81, %c128_82] : memref<8x320xf32, #tpu.memory_space<vmem>>, vector<8x64xf32>
    tpu.vector_store %arg18[%c0_81, %c128_82], %119 {strides = array<i32>} : memref<8x320xf32, #tpu.memory_space<vmem>>, vector<8x64xf32>,
    %c0_i32_83 = arith.constant 0 : i32
    %121 = vector.broadcast %c0_i32_83 : i32 to vector<1x64xi32>
    %122 = arith.cmpi sgt, %13, %121 : vector<1x64xi32>
    %c7_i32_84 = arith.constant 7 : i32
    %123 = vector.broadcast %c7_i32_84 : i32 to vector<1x64xi32>
    %124 = arith.cmpi slt, %13, %123 : vector<1x64xi32>
    %c0_85 = arith.constant 0 : index
    %c119 = arith.constant 119 : index
    %125 = vector.load %arg18[%c0_85, %c119] : memref<8x320xf32, #tpu.memory_space<vmem>>, vector<8x64xf32>
    %cst_86 = arith.constant 0.000000e+00 : f32
    %126 = vector.shape_cast %122 : vector<1x64xi1> to vector<1x64xi1>
    %127 = vector.broadcast %126 : vector<1x64xi1> to vector<8x64xi1>
    %128 = vector.broadcast %cst_86 : f32 to vector<8x64xf32>
    %129 = arith.select %127, %125, %128 : vector<8x64xi1>, vector<8x64xf32>
    %c0_87 = arith.constant 0 : index
    %c120 = arith.constant 120 : index
    %130 = vector.load %arg18[%c0_87, %c120] : memref<8x320xf32, #tpu.memory_space<vmem>>, vector<8x64xf32>
    %c0_88 = arith.constant 0 : index
    %c121 = arith.constant 121 : index
    %131 = vector.load %arg18[%c0_88, %c121] : memref<8x320xf32, #tpu.memory_space<vmem>>, vector<8x64xf32>
    %cst_89 = arith.constant 0.000000e+00 : f32
    %132 = vector.shape_cast %124 : vector<1x64xi1> to vector<1x64xi1>
    %133 = vector.broadcast %132 : vector<1x64xi1> to vector<8x64xi1>
    %134 = vector.broadcast %cst_89 : f32 to vector<8x64xf32>
    %135 = arith.select %133, %131, %134 : vector<8x64xi1>, vector<8x64xf32>
    %c0_90 = arith.constant 0 : index
    %c127_91 = arith.constant 127 : index
    %136 = vector.load %arg18[%c0_90, %c127_91] : memref<8x320xf32, #tpu.memory_space<vmem>>, vector<8x64xf32>
    %cst_92 = arith.constant 0.000000e+00 : f32
    %137 = vector.shape_cast %122 : vector<1x64xi1> to vector<1x64xi1>
    %138 = vector.broadcast %137 : vector<1x64xi1> to vector<8x64xi1>
    %139 = vector.broadcast %cst_92 : f32 to vector<8x64xf32>
    %140 = arith.select %138, %136, %139 : vector<8x64xi1>, vector<8x64xf32>
    %c0_93 = arith.constant 0 : index
    %c128_94 = arith.constant 128 : index
    %141 = vector.load %arg18[%c0_93, %c128_94] : memref<8x320xf32, #tpu.memory_space<vmem>>, vector<8x64xf32>
    %c0_95 = arith.constant 0 : index
    %c129_96 = arith.constant 129 : index
    %142 = vector.load %arg18[%c0_95, %c129_96] : memref<8x320xf32, #tpu.memory_space<vmem>>, vector<8x64xf32>
    %cst_97 = arith.constant 0.000000e+00 : f32
    %143 = vector.shape_cast %124 : vector<1x64xi1> to vector<1x64xi1>
    %144 = vector.broadcast %143 : vector<1x64xi1> to vector<8x64xi1>
    %145 = vector.broadcast %cst_97 : f32 to vector<8x64xf32>
    %146 = arith.select %144, %142, %145 : vector<8x64xi1>, vector<8x64xf32>
    %c0_98 = arith.constant 0 : index
    %c135 = arith.constant 135 : index
    %147 = vector.load %arg18[%c0_98, %c135] : memref<8x320xf32, #tpu.memory_space<vmem>>, vector<8x64xf32>
    %cst_99 = arith.constant 0.000000e+00 : f32
    %148 = vector.shape_cast %122 : vector<1x64xi1> to vector<1x64xi1>
    %149 = vector.broadcast %148 : vector<1x64xi1> to vector<8x64xi1>
    %150 = vector.broadcast %cst_99 : f32 to vector<8x64xf32>
    %151 = arith.select %149, %147, %150 : vector<8x64xi1>, vector<8x64xf32>
    %c0_100 = arith.constant 0 : index
    %c136 = arith.constant 136 : index
    %152 = vector.load %arg18[%c0_100, %c136] : memref<8x320xf32, #tpu.memory_space<vmem>>, vector<8x64xf32>
    %c0_101 = arith.constant 0 : index
    %c137 = arith.constant 137 : index
    %153 = vector.load %arg18[%c0_101, %c137] : memref<8x320xf32, #tpu.memory_space<vmem>>, vector<8x64xf32>
    %cst_102 = arith.constant 0.000000e+00 : f32
    %154 = vector.shape_cast %124 : vector<1x64xi1> to vector<1x64xi1>
    %155 = vector.broadcast %154 : vector<1x64xi1> to vector<8x64xi1>
    %156 = vector.broadcast %cst_102 : f32 to vector<8x64xf32>
    %157 = arith.select %155, %153, %156 : vector<8x64xi1>, vector<8x64xf32>
    %158 = tpu.concatenate %129, %130, %135, %140, %141, %146, %151, %152, %157 in 0 : vector<8x64xf32>, vector<8x64xf32>, vector<8x64xf32>, vector<8x64xf32>, vector<8x64xf32>, vector<8x64xf32>, vector<8x64xf32>, vector<8x64xf32>, vector<8x64xf32> -> vector<72x64xf32>
    %159 = arith.truncf %158 : vector<72x64xf32> to vector<72x64xbf16>
    %c0_103 = arith.constant 0 : index
    %c0_104 = arith.constant 0 : index
    %160 = vector.load %arg7[%c0_103, %c0_104] : memref<16x72xbf16, #tpu.memory_space<vmem>>, vector<16x72xbf16>
    %cst_105 = arith.constant dense<0.000000e+00> : vector<16x64xf32>
    %161 = tpu.matmul %160, %159, %cst_105 {dimension_numbers = #tpu.dot_dimension_numbers<[1], [0], [0], [1], [0, 0, 1, 1], [], []>} : vector<16x72xbf16>, vector<72x64xbf16>, vector<16x64xf32> -> vector<16x64xf32>
    %c0_106 = arith.constant 0 : index
    %c0_107 = arith.constant 0 : index
    %162 = vector.load %arg8[%c0_106, %c0_107] : memref<16x1xf32, #tpu.memory_space<vmem>>, vector<16x1xf32>
    %163 = vector.broadcast %162 : vector<16x1xf32> to vector<16x64xf32>
    %164 = arith.addf %161, %163 : vector<16x64xf32>
    %cst_108 = arith.constant 0.000000e+00 : f32
    %165 = vector.broadcast %cst_108 : f32 to vector<16x64xf32>
    %166 = arith.maximumf %164, %165 : vector<16x64xf32>
    %167 = arith.truncf %166 : vector<16x64xf32> to vector<16x64xbf16>
    %c0_109 = arith.constant 0 : index
    %c0_110 = arith.constant 0 : index
    %168 = vector.load %arg9[%c0_109, %c0_110] : memref<64x256xbf16, #tpu.memory_space<vmem>>, vector<64x256xbf16>
    %cst_111 = arith.constant dense<0.000000e+00> : vector<16x256xf32>
    %169 = tpu.matmul %167, %168, %cst_111 {dimension_numbers = #tpu.dot_dimension_numbers<[1], [0], [0], [1], [0, 0, 1, 1], [], []>} : vector<16x64xbf16>, vector<64x256xbf16>, vector<16x256xf32> -> vector<16x256xf32>
    %c0_112 = arith.constant 0 : index
    %c128_113 = arith.constant 128 : index
    %170 = vector.load %arg17[%c0_112, %c128_113] : memref<24x512xf32, #tpu.memory_space<vmem>>, vector<16x256xf32>
    tpu.vector_store %arg17[%c0_112, %c128_113], %169 {strides = array<i32>} : memref<24x512xf32, #tpu.memory_space<vmem>>, vector<16x256xf32>,
    %c0_i32_114 = arith.constant 0 : i32
    %171 = vector.broadcast %c0_i32_114 : i32 to vector<1x256xi32>
    %172 = arith.cmpi sgt, %10, %171 : vector<1x256xi32>
    %c15_i32_115 = arith.constant 15 : i32
    %173 = vector.broadcast %c15_i32_115 : i32 to vector<1x256xi32>
    %174 = arith.cmpi slt, %10, %173 : vector<1x256xi32>
    %c0_116 = arith.constant 0 : index
    %c111_117 = arith.constant 111 : index
    %175 = vector.load %arg17[%c0_116, %c111_117] : memref<24x512xf32, #tpu.memory_space<vmem>>, vector<24x256xf32>
    %cst_118 = arith.constant 0.000000e+00 : f32
    %176 = vector.shape_cast %172 : vector<1x256xi1> to vector<1x256xi1>
    %177 = vector.broadcast %176 : vector<1x256xi1> to vector<24x256xi1>
    %178 = vector.broadcast %cst_118 : f32 to vector<24x256xf32>
    %179 = arith.select %177, %175, %178 : vector<24x256xi1>, vector<24x256xf32>
    %c0_119 = arith.constant 0 : index
    %c112_120 = arith.constant 112 : index
    %180 = vector.load %arg17[%c0_119, %c112_120] : memref<24x512xf32, #tpu.memory_space<vmem>>, vector<24x256xf32>
    %c0_121 = arith.constant 0 : index
    %c113_122 = arith.constant 113 : index
    %181 = vector.load %arg17[%c0_121, %c113_122] : memref<24x512xf32, #tpu.memory_space<vmem>>, vector<24x256xf32>
    %cst_123 = arith.constant 0.000000e+00 : f32
    %182 = vector.shape_cast %174 : vector<1x256xi1> to vector<1x256xi1>
    %183 = vector.broadcast %182 : vector<1x256xi1> to vector<24x256xi1>
    %184 = vector.broadcast %cst_123 : f32 to vector<24x256xf32>
    %185 = arith.select %183, %181, %184 : vector<24x256xi1>, vector<24x256xf32>
    %c0_124 = arith.constant 0 : index
    %c127_125 = arith.constant 127 : index
    %186 = vector.load %arg17[%c0_124, %c127_125] : memref<24x512xf32, #tpu.memory_space<vmem>>, vector<24x256xf32>
    %cst_126 = arith.constant 0.000000e+00 : f32
    %187 = vector.shape_cast %172 : vector<1x256xi1> to vector<1x256xi1>
    %188 = vector.broadcast %187 : vector<1x256xi1> to vector<24x256xi1>
    %189 = vector.broadcast %cst_126 : f32 to vector<24x256xf32>
    %190 = arith.select %188, %186, %189 : vector<24x256xi1>, vector<24x256xf32>
    %c0_127 = arith.constant 0 : index
    %c128_128 = arith.constant 128 : index
    %191 = vector.load %arg17[%c0_127, %c128_128] : memref<24x512xf32, #tpu.memory_space<vmem>>, vector<24x256xf32>
    %c0_129 = arith.constant 0 : index
    %c129_130 = arith.constant 129 : index
    %192 = vector.load %arg17[%c0_129, %c129_130] : memref<24x512xf32, #tpu.memory_space<vmem>>, vector<24x256xf32>
    %cst_131 = arith.constant 0.000000e+00 : f32
    %193 = vector.shape_cast %174 : vector<1x256xi1> to vector<1x256xi1>
    %194 = vector.broadcast %193 : vector<1x256xi1> to vector<24x256xi1>
    %195 = vector.broadcast %cst_131 : f32 to vector<24x256xf32>
    %196 = arith.select %194, %192, %195 : vector<24x256xi1>, vector<24x256xf32>
    %c0_132 = arith.constant 0 : index
    %c143_133 = arith.constant 143 : index
    %197 = vector.load %arg17[%c0_132, %c143_133] : memref<24x512xf32, #tpu.memory_space<vmem>>, vector<24x256xf32>
    %cst_134 = arith.constant 0.000000e+00 : f32
    %198 = vector.shape_cast %172 : vector<1x256xi1> to vector<1x256xi1>
    %199 = vector.broadcast %198 : vector<1x256xi1> to vector<24x256xi1>
    %200 = vector.broadcast %cst_134 : f32 to vector<24x256xf32>
    %201 = arith.select %199, %197, %200 : vector<24x256xi1>, vector<24x256xf32>
    %c0_135 = arith.constant 0 : index
    %c144_136 = arith.constant 144 : index
    %202 = vector.load %arg17[%c0_135, %c144_136] : memref<24x512xf32, #tpu.memory_space<vmem>>, vector<24x256xf32>
    %c0_137 = arith.constant 0 : index
    %c145_138 = arith.constant 145 : index
    %203 = vector.load %arg17[%c0_137, %c145_138] : memref<24x512xf32, #tpu.memory_space<vmem>>, vector<24x256xf32>
    %cst_139 = arith.constant 0.000000e+00 : f32
    %204 = vector.shape_cast %174 : vector<1x256xi1> to vector<1x256xi1>
    %205 = vector.broadcast %204 : vector<1x256xi1> to vector<24x256xi1>
    %206 = vector.broadcast %cst_139 : f32 to vector<24x256xf32>
    %207 = arith.select %205, %203, %206 : vector<24x256xi1>, vector<24x256xf32>
    %208 = tpu.concatenate %179, %180, %185, %190, %191, %196, %201, %202, %207 in 0 : vector<24x256xf32>, vector<24x256xf32>, vector<24x256xf32>, vector<24x256xf32>, vector<24x256xf32>, vector<24x256xf32>, vector<24x256xf32>, vector<24x256xf32>, vector<24x256xf32> -> vector<216x256xf32>
    %209 = arith.truncf %208 : vector<216x256xf32> to vector<216x256xbf16>
    %c0_140 = arith.constant 0 : index
    %c0_141 = arith.constant 0 : index
    %210 = vector.load %arg10[%c0_140, %c0_141] : memref<8x216xbf16, #tpu.memory_space<vmem>>, vector<8x216xbf16>
    %cst_142 = arith.constant dense<0.000000e+00> : vector<8x256xf32>
    %211 = tpu.matmul %210, %209, %cst_142 {dimension_numbers = #tpu.dot_dimension_numbers<[1], [0], [0], [1], [0, 0, 1, 1], [], []>} : vector<8x216xbf16>, vector<216x256xbf16>, vector<8x256xf32> -> vector<8x256xf32>
    %c0_143 = arith.constant 0 : index
    %c0_144 = arith.constant 0 : index
    %212 = vector.load %arg11[%c0_143, %c0_144] : memref<8x1xf32, #tpu.memory_space<vmem>>, vector<8x1xf32>
    %213 = vector.broadcast %212 : vector<8x1xf32> to vector<8x256xf32>
    %214 = arith.addf %211, %213 : vector<8x256xf32>
    %cst_145 = arith.constant 0.000000e+00 : f32
    %215 = vector.broadcast %cst_145 : f32 to vector<8x256xf32>
    %216 = arith.maximumf %214, %215 : vector<8x256xf32>
    %c0_146 = arith.constant 0 : index
    %c0_147 = arith.constant 0 : index
    %217 = vector.load %arg12[%c0_146, %c0_147] : memref<1x8xbf16, #tpu.memory_space<vmem>>, vector<1x8xbf16>
    %218 = arith.truncf %216 : vector<8x256xf32> to vector<8x256xbf16>
    %cst_148 = arith.constant dense<0.000000e+00> : vector<1x256xf32>
    %219 = tpu.matmul %217, %218, %cst_148 {dimension_numbers = #tpu.dot_dimension_numbers<[1], [0], [0], [1], [0, 0, 1, 1], [], []>} : vector<1x8xbf16>, vector<8x256xbf16>, vector<1x256xf32> -> vector<1x256xf32>
    %c0_149 = arith.constant 0 : index
    %c0_150 = arith.constant 0 : index
    %220 = vector.load %arg13[%c0_149, %c0_150] : memref<1x1xf32, #tpu.memory_space<vmem>>, vector<1x1xf32>
    %221 = vector.broadcast %220 : vector<1x1xf32> to vector<1x256xf32>
    %222 = arith.addf %219, %221 : vector<1x256xf32>
    %223 = arith.negf %222 : vector<1x256xf32>
    %224 = math.exp %223 : vector<1x256xf32>
    %cst_151 = arith.constant 1.000000e+00 : f32
    %225 = vector.broadcast %cst_151 : f32 to vector<1x256xf32>
    %226 = arith.addf %225, %224 : vector<1x256xf32>
    %227 = arith.divf %225, %226 : vector<1x256xf32>
    %c0_152 = arith.constant 0 : index
    %c0_153 = arith.constant 0 : index
    %c0_154 = arith.constant 0 : index
    %228 = vector.load %arg14[%c0_152, %c0_153, %c0_154] : memref<1x1x256xf32, #tpu.memory_space<vmem>>, vector<1x1x256xf32>
    %229 = vector.shape_cast %228 : vector<1x1x256xf32> to vector<1x256xf32>
    %230 = vector.shape_cast %227 : vector<1x256xf32> to vector<1x1x256xf32>
    tpu.vector_store %arg14[%c0_152, %c0_153, %c0_154], %230 {strides = array<i32>} : memref<1x1x256xf32, #tpu.memory_space<vmem>>, vector<1x1x256xf32>,
    return
  }
  func.func @transform_0(%arg0: i32) -> (i32, i32, i32) {
    %c0_i32 = arith.constant 0 : i32
    %c0_i32_0 = arith.constant 0 : i32
    %c0_i32_1 = arith.constant 0 : i32
    return %arg0, %c0_i32, %c0_i32_0 : i32, i32, i32
  }
  func.func @transform_1(%arg0: i32) -> (i32, i32) {
    %c0_i32 = arith.constant 0 : i32
    %c0_i32_0 = arith.constant 0 : i32
    %c0_i32_1 = arith.constant 0 : i32
    return %c0_i32, %c0_i32_0 : i32, i32
  }
  func.func @transform_2(%arg0: i32) -> (i32, i32) {
    %c0_i32 = arith.constant 0 : i32
    %c0_i32_0 = arith.constant 0 : i32
    %c0_i32_1 = arith.constant 0 : i32
    return %c0_i32, %c0_i32_0 : i32, i32
  }
  func.func @transform_3(%arg0: i32) -> (i32, i32) {
    %c0_i32 = arith.constant 0 : i32
    %c0_i32_0 = arith.constant 0 : i32
    %c0_i32_1 = arith.constant 0 : i32
    return %c0_i32, %c0_i32_0 : i32, i32
  }
  func.func @transform_4(%arg0: i32) -> (i32, i32) {
    %c0_i32 = arith.constant 0 : i32
    %c0_i32_0 = arith.constant 0 : i32
    %c0_i32_1 = arith.constant 0 : i32
    return %c0_i32, %c0_i32_0 : i32, i32
  }
  func.func @transform_5(%arg0: i32) -> (i32, i32) {
    %c0_i32 = arith.constant 0 : i32
    %c0_i32_0 = arith.constant 0 : i32
    %c0_i32_1 = arith.constant 0 : i32
    return %c0_i32, %c0_i32_0 : i32, i32
  }
  func.func @transform_6(%arg0: i32) -> (i32, i32) {
    %c0_i32 = arith.constant 0 : i32
    %c0_i32_0 = arith.constant 0 : i32
    %c0_i32_1 = arith.constant 0 : i32
    return %c0_i32, %c0_i32_0 : i32, i32
  }
  func.func @transform_7(%arg0: i32) -> (i32, i32) {
    %c0_i32 = arith.constant 0 : i32
    %c0_i32_0 = arith.constant 0 : i32
    %c0_i32_1 = arith.constant 0 : i32
    return %c0_i32, %c0_i32_0 : i32, i32
  }
  func.func @transform_8(%arg0: i32) -> (i32, i32) {
    %c0_i32 = arith.constant 0 : i32
    %c0_i32_0 = arith.constant 0 : i32
    %c0_i32_1 = arith.constant 0 : i32
    return %c0_i32, %c0_i32_0 : i32, i32
  }
  func.func @transform_9(%arg0: i32) -> (i32, i32) {
    %c0_i32 = arith.constant 0 : i32
    %c0_i32_0 = arith.constant 0 : i32
    %c0_i32_1 = arith.constant 0 : i32
    return %c0_i32, %c0_i32_0 : i32, i32
  }
  func.func @transform_10(%arg0: i32) -> (i32, i32) {
    %c0_i32 = arith.constant 0 : i32
    %c0_i32_0 = arith.constant 0 : i32
    %c0_i32_1 = arith.constant 0 : i32
    return %c0_i32, %c0_i32_0 : i32, i32
  }
  func.func @transform_11(%arg0: i32) -> (i32, i32) {
    %c0_i32 = arith.constant 0 : i32
    %c0_i32_0 = arith.constant 0 : i32
    %c0_i32_1 = arith.constant 0 : i32
    return %c0_i32, %c0_i32_0 : i32, i32
  }
  func.func @transform_12(%arg0: i32) -> (i32, i32) {
    %c0_i32 = arith.constant 0 : i32
    %c0_i32_0 = arith.constant 0 : i32
    %c0_i32_1 = arith.constant 0 : i32
    return %c0_i32, %c0_i32_0 : i32, i32
  }
  func.func @transform_13(%arg0: i32) -> (i32, i32, i32) {
    %c0_i32 = arith.constant 0 : i32
    %c0_i32_0 = arith.constant 0 : i32
    %c0_i32_1 = arith.constant 0 : i32
    return %arg0, %c0_i32, %c0_i32_0 : i32, i32, i32
  }
}

</mosaic_0001>

<llo_original>
// kernel: layout_segmentation_forward.1
$region0: #{layout_segmentation_forward.1}
  #allocation0 [shape = 'u32[]', space=smem, size = 0x4, offset = 0x4, fixed_abs, tag = 'smem constant byte address 0x4 - core index']
  #allocation1 [shape = 'u32[144,128]{1,0:T(1,128)}', space=vmem, size = 0x12000, scoped, tag = 'internal scratch']
  #allocation2 [shape = 'f32[8,512]{1,0:T(8,128)}', space=vmem, size = 0x4000, scoped, tag = 'scratch operand']
  #allocation3 [shape = 'f32[8,512]{1,0:T(8,128)}', space=vmem, size = 0x4000, scoped, tag = 'scratch operand']
  #allocation4 [shape = 'f32[24,512]{1,0:T(8,128)}', space=vmem, size = 0xc000, scoped, tag = 'scratch operand']
  #allocation5 [shape = 'f32[8,320]{1,0:T(8,128)}', space=vmem, size = 0x3000, scoped, tag = 'scratch operand']
  #allocation6 [shape = 'f32[1,1]{1,0:T(1,128)S(1)}', space=vmem, size = 0x200, scoped, tag = 'scoped memory for layout_segmentation_forward.1']
  %s0 = inlined_call_operand.vmem [shape: f32[2,8,256], index: 0, kind: input, shape index: {}]
  %s1 = inlined_call_operand.vmem [shape: bf16[8,72], index: 1, kind: input, shape index: {}]
  %s2 = inlined_call_operand.vmem [shape: f32[8,1], index: 2, kind: input, shape index: {}]
  %s3 = inlined_call_operand.vmem [shape: bf16[8,72], index: 3, kind: input, shape index: {}]
  %s4 = inlined_call_operand.vmem [shape: f32[8,1], index: 4, kind: input, shape index: {}]
  %s5 = inlined_call_operand.vmem [shape: bf16[256,64], index: 5, kind: input, shape index: {}]
  %s6 = inlined_call_operand.vmem [shape: bf16[16,72], index: 6, kind: input, shape index: {}]
  %s7 = inlined_call_operand.vmem [shape: f32[16,1], index: 7, kind: input, shape index: {}]
  %s8 = inlined_call_operand.vmem [shape: bf16[64,256], index: 8, kind: input, shape index: {}]
  %s9 = inlined_call_operand.vmem [shape: bf16[8,216], index: 9, kind: input, shape index: {}]
  %s10 = inlined_call_operand.vmem [shape: f32[8,1], index: 10, kind: input, shape index: {}]
  %s11 = inlined_call_operand.vmem [shape: bf16[1,8], index: 11, kind: input, shape index: {}]
  %s12 = inlined_call_operand.<no memory space> [shape: f32[1,1], index: 12, kind: input, shape index: {}]
  %s13 = inlined_call_operand.vmem [shape: f32[2,1,256], index: 13, kind: output, shape index: {}]
  %s14 = sld [smem:[#allocation0]]
  $region85: #{layout_segmentation_forward.1} parent=0
    _
  %s16 = ssub.s32 1, %s14
  %s17 = scalar_select 0, %s16, %s14
  %v18 = vstv %s12
  %19 = vst [vmem:[#allocation6] sm:$0x1] %v18
  loop: start=0, step=1, limit=4
  $region2: #{layout_segmentation_forward.1} parent=0 // loop_pre_header
    _
  $region3: #{layout_segmentation_forward.1} parent=0 // loop_header
    %s21 = sphi 0, %s25
    %p22 = scmp.ge.s32.totalorder %s21, 4
    %s31 = sphi 0, %s33
    %s34 = sphi 0, %s31
    %s35 = sphi 0, %s34
    %s51 = sphi 0, %s35
    %s55 = sphi 0, %s55
    %s57 = sphi 0, %s55
    %s58 = sphi 0, %s57
    %s72 = sphi 0, %s58
    %s76 = sphi 0, %s76
    %s78 = sphi 0, %s76
    %s79 = sphi 0, %s78
    %s93 = sphi 0, %s79
    %s97 = sphi 0, %s97
    %s99 = sphi 0, %s97
    %s100 = sphi 0, %s99
    %s114 = sphi 0, %s100
    %s118 = sphi 0, %s118
    %s120 = sphi 0, %s118
    %s121 = sphi 0, %s120
    %s135 = sphi 0, %s121
    %s139 = sphi 0, %s139
    %s141 = sphi 0, %s139
    %s142 = sphi 0, %s141
    %s156 = sphi 0, %s142
    %s160 = sphi 0, %s160
    %s162 = sphi 0, %s160
    %s163 = sphi 0, %s162
    %s177 = sphi 0, %s163
    %s181 = sphi 0, %s181
    %s183 = sphi 0, %s181
    %s184 = sphi 0, %s183
    %s198 = sphi 0, %s184
    %s202 = sphi 0, %s202
    %s204 = sphi 0, %s202
    %s205 = sphi 0, %s204
    %s219 = sphi 0, %s205
    %s223 = sphi 0, %s223
    %s225 = sphi 0, %s223
    %s226 = sphi 0, %s225
    %s240 = sphi 0, %s226
    %s244 = sphi 0, %s244
    %s246 = sphi 0, %s244
    %s247 = sphi 0, %s246
    %s261 = sphi 0, %s247
    %s265 = sphi 0, %s265
    %s267 = sphi 0, %s265
    %s268 = sphi 0, %s267
    %s282 = sphi 0, %s268
    %s286 = sphi 0, %s286
    %s288 = sphi 0, %s286
    %s289 = sphi 0, %s288
    %s303 = sphi 0, %s289
    %s309 = sphi 0, %s311
    %s312 = sphi 0, %s309
    %s313 = sphi 0, %s312
    %s329 = sphi 0, %s313
  $region4: #{layout_segmentation_forward.1} parent=0 // loop_header_branch
    %24 = sbr.rel (%p22) target = $region8
  $region5: #{layout_segmentation_forward.1} parent=0 // loop_body
    %s26 = ssub.s32 %s21, 1
    %s27 = ssub.s32 %s21, 2
    %s28 = sadd.s32 %s21, 1
    %s29 = ssub.s32 %s21, %s28
    %p30 = scmp.eq.s32.totalorder %s29, 0
    %s32 = sadd.s32 %s31, 1
    %s33 = scalar_select %p30, %s31, %s32
    %p36 = pneg %p30
    %p37 = scmp.eq.s32.totalorder %s21, 1
    %p38 = por %p36, %p37
    %p39 = scmp.ne.s32.totalorder %s31, %s34
    %p40 = scmp.eq.s32.totalorder %s21, 0
    %p41 = por %p39, %p40
    %p42 = scmp.ne.s32.totalorder %s31, %s34
    %p43 = scmp.eq.s32.totalorder %s26, 1
    %p44 = por %p42, %p43
    %p45 = scmp.ne.s32.totalorder %s34, %s35
    %p46 = scmp.eq.s32.totalorder %s26, 0
    %p47 = por %p45, %p46
    %p48 = scmp.ne.s32.totalorder %s34, %s35
    %p49 = scmp.eq.s32.totalorder %s27, 1
    %p50 = por %p48, %p49
    %p52 = scmp.ne.s32.totalorder %s35, %s51
    %p53 = scmp.eq.s32.totalorder %s27, 0
    %p54 = por %p52, %p53
    %s56 = sadd.s32 %s55, 1
    %p59 = scmp.eq.s32.totalorder %s21, 1
    %p60 = scmp.ne.s32.totalorder %s55, %s57
    %p61 = scmp.eq.s32.totalorder %s21, 0
    %p62 = por %p60, %p61
    %p63 = scmp.ne.s32.totalorder %s55, %s57
    %p64 = scmp.eq.s32.totalorder %s26, 1
    %p65 = por %p63, %p64
    %p66 = scmp.ne.s32.totalorder %s57, %s58
    %p67 = scmp.eq.s32.totalorder %s26, 0
    %p68 = por %p66, %p67
    %p69 = scmp.ne.s32.totalorder %s57, %s58
    %p70 = scmp.eq.s32.totalorder %s27, 1
    %p71 = por %p69, %p70
    %p73 = scmp.ne.s32.totalorder %s58, %s72
    %p74 = scmp.eq.s32.totalorder %s27, 0
    %p75 = por %p73, %p74
    %s77 = sadd.s32 %s76, 1
    %p80 = scmp.eq.s32.totalorder %s21, 1
    %p81 = scmp.ne.s32.totalorder %s76, %s78
    %p82 = scmp.eq.s32.totalorder %s21, 0
    %p83 = por %p81, %p82
    %p84 = scmp.ne.s32.totalorder %s76, %s78
    %p85 = scmp.eq.s32.totalorder %s26, 1
    %p86 = por %p84, %p85
    %p87 = scmp.ne.s32.totalorder %s78, %s79
    %p88 = scmp.eq.s32.totalorder %s26, 0
    %p89 = por %p87, %p88
    %p90 = scmp.ne.s32.totalorder %s78, %s79
    %p91 = scmp.eq.s32.totalorder %s27, 1
    %p92 = por %p90, %p91
    %p94 = scmp.ne.s32.totalorder %s79, %s93
    %p95 = scmp.eq.s32.totalorder %s27, 0
    %p96 = por %p94, %p95
    %s98 = sadd.s32 %s97, 1
    %p101 = scmp.eq.s32.totalorder %s21, 1
    %p102 = scmp.ne.s32.totalorder %s97, %s99
    %p103 = scmp.eq.s32.totalorder %s21, 0
    %p104 = por %p102, %p103
    %p105 = scmp.ne.s32.totalorder %s97, %s99
    %p106 = scmp.eq.s32.totalorder %s26, 1
    %p107 = por %p105, %p106
    %p108 = scmp.ne.s32.totalorder %s99, %s100
    %p109 = scmp.eq.s32.totalorder %s26, 0
    %p110 = por %p108, %p109
    %p111 = scmp.ne.s32.totalorder %s99, %s100
    %p112 = scmp.eq.s32.totalorder %s27, 1
    %p113 = por %p111, %p112
    %p115 = scmp.ne.s32.totalorder %s100, %s114
    %p116 = scmp.eq.s32.totalorder %s27, 0
    %p117 = por %p115, %p116
    %s119 = sadd.s32 %s118, 1
    %p122 = scmp.eq.s32.totalorder %s21, 1
    %p123 = scmp.ne.s32.totalorder %s118, %s120
    %p124 = scmp.eq.s32.totalorder %s21, 0
    %p125 = por %p123, %p124
    %p126 = scmp.ne.s32.totalorder %s118, %s120
    %p127 = scmp.eq.s32.totalorder %s26, 1
    %p128 = por %p126, %p127
    %p129 = scmp.ne.s32.totalorder %s120, %s121
    %p130 = scmp.eq.s32.totalorder %s26, 0
    %p131 = por %p129, %p130
    %p132 = scmp.ne.s32.totalorder %s120, %s121
    %p133 = scmp.eq.s32.totalorder %s27, 1
    %p134 = por %p132, %p133
    %p136 = scmp.ne.s32.totalorder %s121, %s135
    %p137 = scmp.eq.s32.totalorder %s27, 0
    %p138 = por %p136, %p137
    %s140 = sadd.s32 %s139, 1
    %p143 = scmp.eq.s32.totalorder %s21, 1
    %p144 = scmp.ne.s32.totalorder %s139, %s141
    %p145 = scmp.eq.s32.totalorder %s21, 0
    %p146 = por %p144, %p145
    %p147 = scmp.ne.s32.totalorder %s139, %s141
    %p148 = scmp.eq.s32.totalorder %s26, 1
    %p149 = por %p147, %p148
    %p150 = scmp.ne.s32.totalorder %s141, %s142
    %p151 = scmp.eq.s32.totalorder %s26, 0
    %p152 = por %p150, %p151
    %p153 = scmp.ne.s32.totalorder %s141, %s142
    %p154 = scmp.eq.s32.totalorder %s27, 1
    %p155 = por %p153, %p154
    %p157 = scmp.ne.s32.totalorder %s142, %s156
    %p158 = scmp.eq.s32.totalorder %s27, 0
    %p159 = por %p157, %p158
    %s161 = sadd.s32 %s160, 1
    %p164 = scmp.eq.s32.totalorder %s21, 1
    %p165 = scmp.ne.s32.totalorder %s160, %s162
    %p166 = scmp.eq.s32.totalorder %s21, 0
    %p167 = por %p165, %p166
    %p168 = scmp.ne.s32.totalorder %s160, %s162
    %p169 = scmp.eq.s32.totalorder %s26, 1
    %p170 = por %p168, %p169
    %p171 = scmp.ne.s32.totalorder %s162, %s163
    %p172 = scmp.eq.s32.totalorder %s26, 0
    %p173 = por %p171, %p172
    %p174 = scmp.ne.s32.totalorder %s162, %s163
    %p175 = scmp.eq.s32.totalorder %s27, 1
    %p176 = por %p174, %p175
    %p178 = scmp.ne.s32.totalorder %s163, %s177
    %p179 = scmp.eq.s32.totalorder %s27, 0
    %p180 = por %p178, %p179
    %s182 = sadd.s32 %s181, 1
    %p185 = scmp.eq.s32.totalorder %s21, 1
    %p186 = scmp.ne.s32.totalorder %s181, %s183
    %p187 = scmp.eq.s32.totalorder %s21, 0
    %p188 = por %p186, %p187
    %p189 = scmp.ne.s32.totalorder %s181, %s183
    %p190 = scmp.eq.s32.totalorder %s26, 1
    %p191 = por %p189, %p190
    %p192 = scmp.ne.s32.totalorder %s183, %s184
    %p193 = scmp.eq.s32.totalorder %s26, 0
    %p194 = por %p192, %p193
    %p195 = scmp.ne.s32.totalorder %s183, %s184
    %p196 = scmp.eq.s32.totalorder %s27, 1
    %p197 = por %p195, %p196
    %p199 = scmp.ne.s32.totalorder %s184, %s198
    %p200 = scmp.eq.s32.totalorder %s27, 0
    %p201 = por %p199, %p200
    %s203 = sadd.s32 %s202, 1
    %p206 = scmp.eq.s32.totalorder %s21, 1
    %p207 = scmp.ne.s32.totalorder %s202, %s204
    %p208 = scmp.eq.s32.totalorder %s21, 0
    %p209 = por %p207, %p208
    %p210 = scmp.ne.s32.totalorder %s202, %s204
    %p211 = scmp.eq.s32.totalorder %s26, 1
    %p212 = por %p210, %p211
    %p213 = scmp.ne.s32.totalorder %s204, %s205
    %p214 = scmp.eq.s32.totalorder %s26, 0
    %p215 = por %p213, %p214
    %p216 = scmp.ne.s32.totalorder %s204, %s205
    %p217 = scmp.eq.s32.totalorder %s27, 1
    %p218 = por %p216, %p217
    %p220 = scmp.ne.s32.totalorder %s205, %s219
    %p221 = scmp.eq.s32.totalorder %s27, 0
    %p222 = por %p220, %p221
    %s224 = sadd.s32 %s223, 1
    %p227 = scmp.eq.s32.totalorder %s21, 1
    %p228 = scmp.ne.s32.totalorder %s223, %s225
    %p229 = scmp.eq.s32.totalorder %s21, 0
    %p230 = por %p228, %p229
    %p231 = scmp.ne.s32.totalorder %s223, %s225
    %p232 = scmp.eq.s32.totalorder %s26, 1
    %p233 = por %p231, %p232
    %p234 = scmp.ne.s32.totalorder %s225, %s226
    %p235 = scmp.eq.s32.totalorder %s26, 0
    %p236 = por %p234, %p235
    %p237 = scmp.ne.s32.totalorder %s225, %s226
    %p238 = scmp.eq.s32.totalorder %s27, 1
    %p239 = por %p237, %p238
    %p241 = scmp.ne.s32.totalorder %s226, %s240
    %p242 = scmp.eq.s32.totalorder %s27, 0
    %p243 = por %p241, %p242
    %s245 = sadd.s32 %s244, 1
    %p248 = scmp.eq.s32.totalorder %s21, 1
    %p249 = scmp.ne.s32.totalorder %s244, %s246
    %p250 = scmp.eq.s32.totalorder %s21, 0
    %p251 = por %p249, %p250
    %p252 = scmp.ne.s32.totalorder %s244, %s246
    %p253 = scmp.eq.s32.totalorder %s26, 1
    %p254 = por %p252, %p253
    %p255 = scmp.ne.s32.totalorder %s246, %s247
    %p256 = scmp.eq.s32.totalorder %s26, 0
    %p257 = por %p255, %p256
    %p258 = scmp.ne.s32.totalorder %s246, %s247
    %p259 = scmp.eq.s32.totalorder %s27, 1
    %p260 = por %p258, %p259
    %p262 = scmp.ne.s32.totalorder %s247, %s261
    %p263 = scmp.eq.s32.totalorder %s27, 0
    %p264 = por %p262, %p263
    %s266 = sadd.s32 %s265, 1
    %p269 = scmp.eq.s32.totalorder %s21, 1
    %p270 = scmp.ne.s32.totalorder %s265, %s267
    %p271 = scmp.eq.s32.totalorder %s21, 0
    %p272 = por %p270, %p271
    %p273 = scmp.ne.s32.totalorder %s265, %s267
    %p274 = scmp.eq.s32.totalorder %s26, 1
    %p275 = por %p273, %p274
    %p276 = scmp.ne.s32.totalorder %s267, %s268
    %p277 = scmp.eq.s32.totalorder %s26, 0
    %p278 = por %p276, %p277
    %p279 = scmp.ne.s32.totalorder %s267, %s268
    %p280 = scmp.eq.s32.totalorder %s27, 1
    %p281 = por %p279, %p280
    %p283 = scmp.ne.s32.totalorder %s268, %s282
    %p284 = scmp.eq.s32.totalorder %s27, 0
    %p285 = por %p283, %p284
    %s287 = sadd.s32 %s286, 1
    %p290 = scmp.eq.s32.totalorder %s21, 1
    %p291 = scmp.ne.s32.totalorder %s286, %s288
    %p292 = scmp.eq.s32.totalorder %s21, 0
    %p293 = por %p291, %p292
    %p294 = scmp.ne.s32.totalorder %s286, %s288
    %p295 = scmp.eq.s32.totalorder %s26, 1
    %p296 = por %p294, %p295
    %p297 = scmp.ne.s32.totalorder %s288, %s289
    %p298 = scmp.eq.s32.totalorder %s26, 0
    %p299 = por %p297, %p298
    %p300 = scmp.ne.s32.totalorder %s288, %s289
    %p301 = scmp.eq.s32.totalorder %s27, 1
    %p302 = por %p300, %p301
    %p304 = scmp.ne.s32.totalorder %s289, %s303
    %p305 = scmp.eq.s32.totalorder %s27, 0
    %p306 = por %p304, %p305
    %s307 = ssub.s32 %s21, %s28
    %p308 = scmp.eq.s32.totalorder %s307, 0
    %s310 = sadd.s32 %s309, 1
    %s311 = scalar_select %p308, %s309, %s310
    %p314 = pneg %p308
    %p315 = scmp.eq.s32.totalorder %s21, 1
    %p316 = por %p314, %p315
    %p317 = scmp.ne.s32.totalorder %s309, %s312
    %p318 = scmp.eq.s32.totalorder %s21, 0
    %p319 = por %p317, %p318
    %p320 = scmp.ne.s32.totalorder %s309, %s312
    %p321 = scmp.eq.s32.totalorder %s26, 1
    %p322 = por %p320, %p321
    %p323 = scmp.ne.s32.totalorder %s312, %s313
    %p324 = scmp.eq.s32.totalorder %s26, 0
    %p325 = por %p323, %p324
    %p326 = scmp.ne.s32.totalorder %s312, %s313
    %p327 = scmp.eq.s32.totalorder %s27, 1
    %p328 = por %p326, %p327
    %p330 = scmp.ne.s32.totalorder %s313, %s329
    %p331 = scmp.eq.s32.totalorder %s27, 0
    %p332 = por %p330, %p331
    %p333 = scmp.le.s32.totalorder 1, %s21
    %p334 = scmp.lt.s32.totalorder %s21, 3
    %p335 = pnand %p333, %p334
    %p336 = pneg %p335
    // Predicated region
    $region9: #{layout_segmentation_forward.1} parent=5 // pred_check
      _
    $region10: #{layout_segmentation_forward.1} parent=5 // pred_check_branch
      %338 = sbr.rel (%p335) target = $region12
    $region11: #{layout_segmentation_forward.1} parent=5 // pred_region
      %s339 = ssub.s32 %s21, 1
      // Predicated region
      $region13: #{layout_segmentation_forward.1} parent=11 // pred_check
        %p340 = pneg %p68
      $region14: #{layout_segmentation_forward.1} parent=11 // pred_check_branch
        %342 = sbr.rel (%p340) target = $region16
      $region15: #{layout_segmentation_forward.1} parent=11 // pred_region
        _
      $region16: #{layout_segmentation_forward.1} parent=11 // pred_fallthru
        _
      // Predicated region
      $region17: #{layout_segmentation_forward.1} parent=11 // pred_check
        %p343 = pneg %p89
      $region18: #{layout_segmentation_forward.1} parent=11 // pred_check_branch
        %345 = sbr.rel (%p343) target = $region20
      $region19: #{layout_segmentation_forward.1} parent=11 // pred_region
        _
      $region20: #{layout_segmentation_forward.1} parent=11 // pred_fallthru
        _
      // Predicated region
      $region21: #{layout_segmentation_forward.1} parent=11 // pred_check
        %p346 = pneg %p110
      $region22: #{layout_segmentation_forward.1} parent=11 // pred_check_branch
        %348 = sbr.rel (%p346) target = $region24
      $region23: #{layout_segmentation_forward.1} parent=11 // pred_region
        _
      $region24: #{layout_segmentation_forward.1} parent=11 // pred_fallthru
        _
      // Predicated region
      $region25: #{layout_segmentation_forward.1} parent=11 // pred_check
        %p349 = pneg %p131
      $region26: #{layout_segmentation_forward.1} parent=11 // pred_check_branch
        %351 = sbr.rel (%p349) target = $region28
      $region27: #{layout_segmentation_forward.1} parent=11 // pred_region
        _
      $region28: #{layout_segmentation_forward.1} parent=11 // pred_fallthru
        _
      // Predicated region
      $region29: #{layout_segmentation_forward.1} parent=11 // pred_check
        %p352 = pneg %p152
      $region30: #{layout_segmentation_forward.1} parent=11 // pred_check_branch
        %354 = sbr.rel (%p352) target = $region32
      $region31: #{layout_segmentation_forward.1} parent=11 // pred_region
        _
      $region32: #{layout_segmentation_forward.1} parent=11 // pred_fallthru
        _
      // Predicated region
      $region33: #{layout_segmentation_forward.1} parent=11 // pred_check
        %p355 = pneg %p173
      $region34: #{layout_segmentation_forward.1} parent=11 // pred_check_branch
        %357 = sbr.rel (%p355) target = $region36
      $region35: #{layout_segmentation_forward.1} parent=11 // pred_region
        _
      $region36: #{layout_segmentation_forward.1} parent=11 // pred_fallthru
        _
      // Predicated region
      $region37: #{layout_segmentation_forward.1} parent=11 // pred_check
        %p358 = pneg %p194
      $region38: #{layout_segmentation_forward.1} parent=11 // pred_check_branch
        %360 = sbr.rel (%p358) target = $region40
      $region39: #{layout_segmentation_forward.1} parent=11 // pred_region
        _
      $region40: #{layout_segmentation_forward.1} parent=11 // pred_fallthru
        _
      // Predicated region
      $region41: #{layout_segmentation_forward.1} parent=11 // pred_check
        %p361 = pneg %p215
      $region42: #{layout_segmentation_forward.1} parent=11 // pred_check_branch
        %363 = sbr.rel (%p361) target = $region44
      $region43: #{layout_segmentation_forward.1} parent=11 // pred_region
        _
      $region44: #{layout_segmentation_forward.1} parent=11 // pred_fallthru
        _
      // Predicated region
      $region45: #{layout_segmentation_forward.1} parent=11 // pred_check
        %p364 = pneg %p236
      $region46: #{layout_segmentation_forward.1} parent=11 // pred_check_branch
        %366 = sbr.rel (%p364) target = $region48
      $region47: #{layout_segmentation_forward.1} parent=11 // pred_region
        _
      $region48: #{layout_segmentation_forward.1} parent=11 // pred_fallthru
        _
      // Predicated region
      $region49: #{layout_segmentation_forward.1} parent=11 // pred_check
        %p367 = pneg %p257
      $region50: #{layout_segmentation_forward.1} parent=11 // pred_check_branch
        %369 = sbr.rel (%p367) target = $region52
      $region51: #{layout_segmentation_forward.1} parent=11 // pred_region
        _
      $region52: #{layout_segmentation_forward.1} parent=11 // pred_fallthru
        _
      // Predicated region
      $region53: #{layout_segmentation_forward.1} parent=11 // pred_check
        %p370 = pneg %p278
      $region54: #{layout_segmentation_forward.1} parent=11 // pred_check_branch
        %372 = sbr.rel (%p370) target = $region56
      $region55: #{layout_segmentation_forward.1} parent=11 // pred_region
        _
      $region56: #{layout_segmentation_forward.1} parent=11 // pred_fallthru
        _
      // Predicated region
      $region57: #{layout_segmentation_forward.1} parent=11 // pred_check
        %p373 = pneg %p299
      $region58: #{layout_segmentation_forward.1} parent=11 // pred_check_branch
        %375 = sbr.rel (%p373) target = $region60
      $region59: #{layout_segmentation_forward.1} parent=11 // pred_region
        _
      $region60: #{layout_segmentation_forward.1} parent=11 // pred_fallthru
        _
    $region12: #{layout_segmentation_forward.1} parent=5 // pred_fallthru
      _
    %p376 = scmp.lt.s32.totalorder %s21, 2
    // Predicated region
    $region61: #{layout_segmentation_forward.1} parent=5 // pred_check
      %p377 = pneg %p376
    $region62: #{layout_segmentation_forward.1} parent=5 // pred_check_branch
      %379 = sbr.rel (%p377) target = $region64
    $region63: #{layout_segmentation_forward.1} parent=5 // pred_region
      // Predicated region
      $region65: #{layout_segmentation_forward.1} parent=63 // pred_check
        %p380 = pneg %p41
      $region66: #{layout_segmentation_forward.1} parent=63 // pred_check_branch
        %382 = sbr.rel (%p380) target = $region68
      $region67: #{layout_segmentation_forward.1} parent=63 // pred_region
        %p383 = scmp.lt.s32.totalorder %s21, 1
        %s384 = scalar_select %p383, %s21, 1
        %s385 = smul.addr %s384, 2
        %s386 = smul.addr %s385, 8
        %s387 = scalar_lea.vmem %s0, %s386
      $region68: #{layout_segmentation_forward.1} parent=63 // pred_fallthru
        _
    $region64: #{layout_segmentation_forward.1} parent=5 // pred_fallthru
      _
    %p388 = scmp.le.s32.totalorder 1, %s21
    %p389 = scmp.lt.s32.totalorder %s21, 3
    %p390 = pnand %p388, %p389
    %p391 = pneg %p390
    // Predicated region
    $region69: #{layout_segmentation_forward.1} parent=5 // pred_check
      _
    $region70: #{layout_segmentation_forward.1} parent=5 // pred_check_branch
      %393 = sbr.rel (%p390) target = $region72
    $region71: #{layout_segmentation_forward.1} parent=5 // pred_region
      %s394 = ssub.s32 %s21, 1
      %p395 = scmp.lt.s32.totalorder %s26, 1
      %s396 = scalar_select %p395, %s26, 1
      %s397 = smul.addr %s396, 2
      %s398 = smul.addr %s397, 8
      %s399 = scalar_lea.vmem %s0, %s398
      %p400 = pneg %p47
      %p401 = pneg %p44
      %p402 = pneg %p68
      %p403 = pneg %p65
      %p404 = pneg %p89
      %p405 = pneg %p86
      %p406 = pneg %p110
      %p407 = pneg %p107
      %p408 = pneg %p131
      %p409 = pneg %p128
      %p410 = pneg %p152
      %p411 = pneg %p149
      %p412 = pneg %p173
      %p413 = pneg %p170
      %p414 = pneg %p194
      %p415 = pneg %p191
      %p416 = pneg %p215
      %p417 = pneg %p212
      %p418 = pneg %p236
      %p419 = pneg %p233
      %p420 = pneg %p257
      %p421 = pneg %p254
      %p422 = pneg %p278
      %p423 = pneg %p275
      %p424 = pneg %p299
      %p425 = pneg %p296
      %p426 = pneg %p325
      %p427 = pneg %p322
      %p428 = scmp.lt.s32.totalorder %s26, 1
      %s429 = scalar_select %p428, %s26, 1
      %s430 = smul.addr %s429, 2
      %s431 = scalar_lea.vmem %s13, %s430
      %p432 = scmp.lt.s32.totalorder %s26, 1
      %s433 = scalar_select %p432, %s26, 1
      %s434 = smul.addr %s433, 2
      %s435 = smul.addr %s434, 8
      %s436 = scalar_lea.vmem %s0, %s435
      %p437 = scmp.lt.s32.totalorder %s26, 1
      %s438 = scalar_select %p437, %s26, 1
      %s439 = smul.addr %s438, 2
      %s440 = scalar_lea.vmem %s13, %s439
      %442 = vst [vmem:[#allocation2] sm:$0xff] 0.0
      %443 = vst [vmem:[#allocation2 + $0x8] sm:$0xff] 0.0
      %444 = vst [vmem:[#allocation2 + $0x10] sm:$0xff] 0.0
      %445 = vst [vmem:[#allocation2 + $0x18] sm:$0xff] 0.0
      %446 = vst [vmem:[#allocation3] sm:$0xff] 0.0
      %447 = vst [vmem:[#allocation3 + $0x8] sm:$0xff] 0.0
      %448 = vst [vmem:[#allocation3 + $0x10] sm:$0xff] 0.0
      %449 = vst [vmem:[#allocation3 + $0x18] sm:$0xff] 0.0
      %450 = vst [vmem:[#allocation4] sm:$0xff] 0.0
      %451 = vst [vmem:[#allocation4 + $0x8] sm:$0xff] 0.0
      %452 = vst [vmem:[#allocation4 + $0x10] sm:$0xff] 0.0
      %453 = vst [vmem:[#allocation4 + $0x18] sm:$0xff] 0.0
      %454 = vst [vmem:[#allocation4 + $0x20] sm:$0xff] 0.0
      %455 = vst [vmem:[#allocation4 + $0x28] sm:$0xff] 0.0
      %456 = vst [vmem:[#allocation4 + $0x30] sm:$0xff] 0.0
      %457 = vst [vmem:[#allocation4 + $0x38] sm:$0xff] 0.0
      %458 = vst [vmem:[#allocation4 + $0x40] sm:$0xff] 0.0
      %459 = vst [vmem:[#allocation4 + $0x48] sm:$0xff] 0.0
      %460 = vst [vmem:[#allocation4 + $0x50] sm:$0xff] 0.0
      %461 = vst [vmem:[#allocation4 + $0x58] sm:$0xff] 0.0
      %462 = vst [vmem:[#allocation5] sm:$0xff] 0.0
      %463 = vst [vmem:[#allocation5 + $0x8] sm:$0xff] 0.0
      %vm464 = vcmask 523264
      %465 = vst.msk [vmem:[#allocation5 + $0x10] sm:$0xff] %vm464, 0.0
      %v466 = vlaneseq
      %v467 = vand.u32 %v466, 127
      %v468 = vadd.s32 %v467, 128
      %v469 = vand.u32 %v467, 15
      %v470 = vand.u32 %v468, 15
      %v471 = vand.u32 %v467, 7
      %v472 = vld [vmem:[%s436] sm:$0xff]
      %v473 = vld [vmem:[%s436 + $0x8] sm:$0xff]
      %474 = vst [vmem:[#allocation2 + $0x8] sm:$0xff] %v472
      %475 = vst [vmem:[#allocation2 + $0x10] sm:$0xff] %v473
      %vm476 = vcmp.gt.s32.totalorder %v469, 0
      %vm477 = vcmp.gt.s32.totalorder %v470, 0
      %vm478 = vcmp.lt.s32.totalorder %v469, 15
      %vm479 = vcmp.lt.s32.totalorder %v470, 15
      %v480 = vld [vmem:[#allocation2] sm:$0xff]
      %v481 = vld [vmem:[#allocation2 + $0x8] sm:$0xff]
      %v482 = vld [vmem:[#allocation2 + $0x10] sm:$0xff]
      %v483 = vsel %vm476, 1, 0
      %v484 = vsel %vm477, 1, 0
      %vm485 = vcmp.eq.s32.totalorder %v483, 1
      %vm486 = vcmp.eq.s32.totalorder %v484, 1
      %490 = vrot.lane.b32.xlu0 %v480, 17
      %v491 = vpop.permute.xlu0 %490
      %492 = vrot.lane.b32.xlu0 %v481, 17
      %v493 = vpop.permute.xlu0 %492
      %494 = vrot.lane.b32.xlu0 %v482, 17
      %v495 = vpop.permute.xlu0 %494
      %vm496 = vcmask 138240
      %v497 = vsel %vm496, %v491, %v493
      %v498 = vsel %vm496, %v493, %v495
      %v501 = vsel %vm485, %v497, 0.0
      %v502 = vsel %vm486, %v498, 0.0
      %v503 = vsel %vm478, 1, 0
      %v504 = vsel %vm479, 1, 0
      %vm505 = vcmp.eq.s32.totalorder %v503, 1
      %vm506 = vcmp.eq.s32.totalorder %v504, 1
      %507 = vrot.lane.b32.xlu0 %v480, 15
      %v508 = vpop.permute.xlu0 %507
      %509 = vrot.lane.b32.xlu0 %v481, 15
      %v510 = vpop.permute.xlu0 %509
      %511 = vrot.lane.b32.xlu0 %v482, 15
      %v512 = vpop.permute.xlu0 %511
      %vm513 = vcmask 121856
      %v514 = vsel %vm513, %v508, %v510
      %v515 = vsel %vm513, %v510, %v512
      %v518 = vsel %vm505, %v514, 0.0
      %v519 = vsel %vm506, %v515, 0.0
      %520 = vrot.lane.b32.xlu0 %v480, 1
      %v521 = vpop.permute.xlu0 %520
      %522 = vrot.lane.b32.xlu0 %v481, 1
      %v523 = vpop.permute.xlu0 %522
      %524 = vrot.lane.b32.xlu0 %v482, 1
      %v525 = vpop.permute.xlu0 %524
      %vm526 = vcmask 7168
      %v527 = vsel %vm526, %v521, %v523
      %v528 = vsel %vm526, %v523, %v525
      %v531 = vsel %vm485, %v527, 0.0
      %v532 = vsel %vm486, %v528, 0.0
      %v533 = vld [vmem:[#allocation2 + $0x8] sm:$0xff]
      %v534 = vld [vmem:[#allocation2 + $0x10] sm:$0xff]
      %v535 = vld [vmem:[#allocation2 + $0x18] sm:$0xff]
      %539 = vrot.lane.b32.xlu0 %v533, 127
      %v540 = vpop.permute.xlu0 %539
      %541 = vrot.lane.b32.xlu0 %v534, 127
      %v542 = vpop.permute.xlu0 %541
      %543 = vrot.lane.b32.xlu0 %v535, 127
      %v544 = vpop.permute.xlu0 %543
      %vm545 = vcmask 1039360
      %v546 = vsel %vm545, %v540, %v542
      %v547 = vsel %vm545, %v542, %v544
      %v550 = vsel %vm505, %v546, 0.0
      %v551 = vsel %vm506, %v547, 0.0
      %552 = vrot.lane.b32.xlu0 %v533, 113
      %v553 = vpop.permute.xlu0 %552
      %554 = vrot.lane.b32.xlu0 %v534, 113
      %v555 = vpop.permute.xlu0 %554
      %556 = vrot.lane.b32.xlu0 %v535, 113
      %v557 = vpop.permute.xlu0 %556
      %vm558 = vcmask 924672
      %v559 = vsel %vm558, %v553, %v555
      %v560 = vsel %vm558, %v555, %v557
      %v563 = vsel %vm485, %v559, 0.0
      %v564 = vsel %vm486, %v560, 0.0
      %565 = vrot.lane.b32.xlu0 %v533, 111
      %v566 = vpop.permute.xlu0 %565
      %567 = vrot.lane.b32.xlu0 %v534, 111
      %v568 = vpop.permute.xlu0 %567
      %569 = vrot.lane.b32.xlu0 %v535, 111
      %v570 = vpop.permute.xlu0 %569
      %vm571 = vcmask 908288
      %v572 = vsel %vm571, %v566, %v568
      %v573 = vsel %vm571, %v568, %v570
      %v576 = vsel %vm505, %v572, 0.0
      %v577 = vsel %vm506, %v573, 0.0
      %578 = vrot.lane.b32.xlu0 %v480, 16
      %v579 = vpop.permute.xlu0 %578
      %580 = vrot.lane.b32.xlu0 %v481, 16
      %v581 = vpop.permute.xlu0 %580
      %582 = vrot.lane.b32.xlu0 %v482, 16
      %v583 = vpop.permute.xlu0 %582
      %vm584 = vcmask 130048
      %v585 = vsel %vm584, %v579, %v581
      %v586 = vsel %vm584, %v581, %v583
      %589 = vrot.lane.b32.xlu0 %v533, 112
      %v590 = vpop.permute.xlu0 %589
      %591 = vrot.lane.b32.xlu0 %v534, 112
      %v592 = vpop.permute.xlu0 %591
      %593 = vrot.lane.b32.xlu0 %v535, 112
      %v594 = vpop.permute.xlu0 %593
      %vm595 = vcmask 916480
      %v596 = vsel %vm595, %v590, %v592
      %v597 = vsel %vm595, %v592, %v594
      %v600 = vpack.c.bf16 %v585, %v501
      %v601 = vpack.c.bf16 %v586, %v502
      %v602 = vpack.c.bf16 %v531, %v518
      %v603 = vpack.c.bf16 %v532, %v519
      %v604 = vpack.c.bf16 %v550, %v481
      %v605 = vpack.c.bf16 %v551, %v482
      %v606 = vpack.c.bf16 %v596, %v563
      %v607 = vpack.c.bf16 %v597, %v564
      %v608 = vpack.c.bf16 %v576, %v576
      %v609 = vpack.c.bf16 %v577, %v577
      %v610 = vld [vmem:[%s1] sm:$0xf]
      %v611 = vld [vmem:[%s2] sm:$0xff]
      %613 = vset.pattern.permute.xlu0 0
      %614 = vperm.xlu0 %613, %v611
      %v615 = vpop.permute.xlu0 %614
      %vm617 = vcmask 588800
      %v619 = vsel %vm617, %v610, 0
      %vm621 = vcmask 1043456
      %v623 = vsel %vm621, %v608, 0
      %v626 = vsel %vm621, %v609, 0
      %628 = vmatprep.subr.bf16.mxu0 0
      %629 = vmatpush1.bf16.msra.mxu0 0
      %630 = vmatprep.subr.bf16.mxu0 0
      %631 = vmatpush1.bf16.msra.mxu0 0
      %632 = vmatprep.subr.bf16.mxu0 0
      %633 = vmatpush1.bf16.msra.mxu0 0
      %634 = vmatprep.subr.bf16.mxu0 %v626
      %635 = vmatpush1.bf16.msra.mxu0 %v623
      %636 = vmatprep.subr.bf16.mxu0 %v607
      %637 = vmatpush1.bf16.msra.mxu0 %v606
      %638 = vmatprep.subr.bf16.mxu0 %v605
      %639 = vmatpush1.bf16.msra.mxu0 %v604
      %640 = vmatprep.subr.bf16.mxu0 %v603
      %641 = vmatpush1.bf16.msra.mxu0 %v602
      %642 = vmatprep.subr.bf16.mxu0 %v601
      %643 = vmatpush1.bf16.msra.mxu0 %v600
      %644 = vmatprep.subr.bf16.mxu0 0
      %645 = vmatpush2.bf16.msra.mxu0 0
      %646 = vmatprep.subr.bf16.mxu0 0
      %647 = vmatpush2.bf16.msra.mxu0 0
      %648 = vmatprep.subr.bf16.mxu0 0
      %649 = vmatpush2.bf16.msra.mxu0 0
      %650 = vmatprep.subr.bf16.mxu0 0
      %651 = vmatpush2.bf16.msra.mxu0 0
      %652 = vmatprep.subr.bf16.mxu0 0
      %653 = vmatpush2.bf16.msra.mxu0 0
      %654 = vmatprep.subr.bf16.mxu0 0
      %655 = vmatpush2.bf16.msra.mxu0 0
      %656 = vmatprep.subr.bf16.mxu0 0
      %657 = vmatpush2.bf16.msra.mxu0 0
      %658 = vmatprep.subr.bf16.mxu0 0
      %659 = vmatpush2.bf16.msra.mxu0 0
      %660 = vmatprep.mubr.bf16.mxu0 0
      %661 = vmatmul.mubr.bf16.gmra.mxu0 %v619
      %v662 = vpop.f32.mrf.mxu0
      %v663 = vadd.f32 %v615, %v662
      %v664 = vpop.f32.mrf.mxu0
      %v665 = vadd.f32 %v615, %v664
      %v666 = vpop.f32.mrf.mxu0
      %v667 = vpop.f32.mrf.mxu0
      %668 = vdwg.mxu0
      %v669 = vmax.f32 %v663, 0.0
      %v670 = vmax.f32 %v665, 0.0
      %671 = vst [vmem:[#allocation3 + $0x8] sm:$0xff] %v669
      %672 = vst [vmem:[#allocation3 + $0x10] sm:$0xff] %v670
      %v673 = vld [vmem:[#allocation3] sm:$0xff]
      %v674 = vld [vmem:[#allocation3 + $0x8] sm:$0xff]
      %v675 = vld [vmem:[#allocation3 + $0x10] sm:$0xff]
      %679 = vrot.lane.b32.xlu0 %v673, 17
      %v680 = vpop.permute.xlu0 %679
      %681 = vrot.lane.b32.xlu0 %v674, 17
      %v682 = vpop.permute.xlu0 %681
      %683 = vrot.lane.b32.xlu0 %v675, 17
      %v684 = vpop.permute.xlu0 %683
      %v685 = vsel %vm496, %v680, %v682
      %v686 = vsel %vm496, %v682, %v684
      %v689 = vsel %vm485, %v685, 0.0
      %v690 = vsel %vm486, %v686, 0.0
      %691 = vrot.lane.b32.xlu0 %v673, 15
      %v692 = vpop.permute.xlu0 %691
      %693 = vrot.lane.b32.xlu0 %v674, 15
      %v694 = vpop.permute.xlu0 %693
      %695 = vrot.lane.b32.xlu0 %v675, 15
      %v696 = vpop.permute.xlu0 %695
      %v697 = vsel %vm513, %v692, %v694
      %v698 = vsel %vm513, %v694, %v696
      %v701 = vsel %vm505, %v697, 0.0
      %v702 = vsel %vm506, %v698, 0.0
      %703 = vrot.lane.b32.xlu0 %v673, 1
      %v704 = vpop.permute.xlu0 %703
      %705 = vrot.lane.b32.xlu0 %v674, 1
      %v706 = vpop.permute.xlu0 %705
      %707 = vrot.lane.b32.xlu0 %v675, 1
      %v708 = vpop.permute.xlu0 %707
      %v709 = vsel %vm526, %v704, %v706
      %v710 = vsel %vm526, %v706, %v708
      %v713 = vsel %vm485, %v709, 0.0
      %v714 = vsel %vm486, %v710, 0.0
      %v715 = vld [vmem:[#allocation3 + $0x8] sm:$0xff]
      %v716 = vld [vmem:[#allocation3 + $0x10] sm:$0xff]
      %v717 = vld [vmem:[#allocation3 + $0x18] sm:$0xff]
      %721 = vrot.lane.b32.xlu0 %v715, 127
      %v722 = vpop.permute.xlu0 %721
      %723 = vrot.lane.b32.xlu0 %v716, 127
      %v724 = vpop.permute.xlu0 %723
      %725 = vrot.lane.b32.xlu0 %v717, 127
      %v726 = vpop.permute.xlu0 %725
      %v727 = vsel %vm545, %v722, %v724
      %v728 = vsel %vm545, %v724, %v726
      %v731 = vsel %vm505, %v727, 0.0
      %v732 = vsel %vm506, %v728, 0.0
      %733 = vrot.lane.b32.xlu0 %v715, 113
      %v734 = vpop.permute.xlu0 %733
      %735 = vrot.lane.b32.xlu0 %v716, 113
      %v736 = vpop.permute.xlu0 %735
      %737 = vrot.lane.b32.xlu0 %v717, 113
      %v738 = vpop.permute.xlu0 %737
      %v739 = vsel %vm558, %v734, %v736
      %v740 = vsel %vm558, %v736, %v738
      %v743 = vsel %vm485, %v739, 0.0
      %v744 = vsel %vm486, %v740, 0.0
      %745 = vrot.lane.b32.xlu0 %v715, 111
      %v746 = vpop.permute.xlu0 %745
      %747 = vrot.lane.b32.xlu0 %v716, 111
      %v748 = vpop.permute.xlu0 %747
      %749 = vrot.lane.b32.xlu0 %v717, 111
      %v750 = vpop.permute.xlu0 %749
      %v751 = vsel %vm571, %v746, %v748
      %v752 = vsel %vm571, %v748, %v750
      %v755 = vsel %vm505, %v751, 0.0
      %v756 = vsel %vm506, %v752, 0.0
      %757 = vrot.lane.b32.xlu0 %v673, 16
      %v758 = vpop.permute.xlu0 %757
      %759 = vrot.lane.b32.xlu0 %v674, 16
      %v760 = vpop.permute.xlu0 %759
      %761 = vrot.lane.b32.xlu0 %v675, 16
      %v762 = vpop.permute.xlu0 %761
      %v763 = vsel %vm584, %v758, %v760
      %v764 = vsel %vm584, %v760, %v762
      %767 = vrot.lane.b32.xlu0 %v715, 112
      %v768 = vpop.permute.xlu0 %767
      %769 = vrot.lane.b32.xlu0 %v716, 112
      %v770 = vpop.permute.xlu0 %769
      %771 = vrot.lane.b32.xlu0 %v717, 112
      %v772 = vpop.permute.xlu0 %771
      %v773 = vsel %vm595, %v768, %v770
      %v774 = vsel %vm595, %v770, %v772
      %v777 = vpack.c.bf16 %v763, %v689
      %v778 = vpack.c.bf16 %v764, %v690
      %v779 = vpack.c.bf16 %v713, %v701
      %v780 = vpack.c.bf16 %v714, %v702
      %v781 = vpack.c.bf16 %v731, %v674
      %v782 = vpack.c.bf16 %v732, %v675
      %v783 = vpack.c.bf16 %v773, %v743
      %v784 = vpack.c.bf16 %v774, %v744
      %v785 = vpack.c.bf16 %v755, %v755
      %v786 = vpack.c.bf16 %v756, %v756
      %v787 = vld [vmem:[%s3] sm:$0xf]
      %v788 = vld [vmem:[%s4] sm:$0xff]
      %790 = vset.pattern.permute.xlu0 0
      %791 = vperm.xlu0 %790, %v788
      %v792 = vpop.permute.xlu0 %791
      %v795 = vsel %vm617, %v787, 0
      %v798 = vsel %vm621, %v785, 0
      %v801 = vsel %vm621, %v786, 0
      %803 = vmatprep.subr.bf16.mxu0 0
      %804 = vmatpush1.bf16.msra.mxu0 0
      %805 = vmatprep.subr.bf16.mxu0 0
      %806 = vmatpush1.bf16.msra.mxu0 0
      %807 = vmatprep.subr.bf16.mxu0 0
      %808 = vmatpush1.bf16.msra.mxu0 0
      %809 = vmatprep.subr.bf16.mxu0 %v801
      %810 = vmatpush1.bf16.msra.mxu0 %v798
      %811 = vmatprep.subr.bf16.mxu0 %v784
      %812 = vmatpush1.bf16.msra.mxu0 %v783
      %813 = vmatprep.subr.bf16.mxu0 %v782
      %814 = vmatpush1.bf16.msra.mxu0 %v781
      %815 = vmatprep.subr.bf16.mxu0 %v780
      %816 = vmatpush1.bf16.msra.mxu0 %v779
      %817 = vmatprep.subr.bf16.mxu0 %v778
      %818 = vmatpush1.bf16.msra.mxu0 %v777
      %819 = vmatprep.subr.bf16.mxu0 0
      %820 = vmatpush2.bf16.msra.mxu0 0
      %821 = vmatprep.subr.bf16.mxu0 0
      %822 = vmatpush2.bf16.msra.mxu0 0
      %823 = vmatprep.subr.bf16.mxu0 0
      %824 = vmatpush2.bf16.msra.mxu0 0
      %825 = vmatprep.subr.bf16.mxu0 0
      %826 = vmatpush2.bf16.msra.mxu0 0
      %827 = vmatprep.subr.bf16.mxu0 0
      %828 = vmatpush2.bf16.msra.mxu0 0
      %829 = vmatprep.subr.bf16.mxu0 0
      %830 = vmatpush2.bf16.msra.mxu0 0
      %831 = vmatprep.subr.bf16.mxu0 0
      %832 = vmatpush2.bf16.msra.mxu0 0
      %833 = vmatprep.subr.bf16.mxu0 0
      %834 = vmatpush2.bf16.msra.mxu0 0
      %835 = vmatprep.mubr.bf16.mxu0 0
      %836 = vmatmul.mubr.bf16.gmra.mxu0 %v795
      %v837 = vpop.f32.mrf.mxu0
      %v838 = vadd.f32 %v792, %v837
      %v839 = vpop.f32.mrf.mxu0
      %v840 = vadd.f32 %v792, %v839
      %v841 = vpop.f32.mrf.mxu0
      %v842 = vpop.f32.mrf.mxu0
      %843 = vdwg.mxu0
      %v844 = vmax.f32 %v838, 0.0
      %v845 = vmax.f32 %v840, 0.0
      %846 = vst [vmem:[#allocation4 + $0x48] sm:$0xff] %v844
      %847 = vst [vmem:[#allocation4 + $0x50] sm:$0xff] %v845
      %v848 = vld [vmem:[#allocation4 + $0x48] sm:$0xff]
      %v849 = vld [vmem:[#allocation4 + $0x50] sm:$0xff]
      %v850 = vld [vmem:[#allocation4 + $0x58] sm:$0xff]
      %854 = vrot.lane.b32.xlu0 %v848, 127
      %v855 = vpop.permute.xlu0 %854
      %856 = vrot.lane.b32.xlu0 %v849, 127
      %v857 = vpop.permute.xlu0 %856
      %858 = vrot.lane.b32.xlu0 %v850, 127
      %v859 = vpop.permute.xlu0 %858
      %v860 = vsel %vm545, %v855, %v857
      %v861 = vsel %vm545, %v857, %v859
      %v864 = vmax.f32 %v844, %v860
      %v865 = vmax.f32 %v845, %v861
      %v867 = vmax.f32 %v848, %v860
      %v868 = vmax.f32 %v849, %v861
      %v869 = vmax.f32 %v850, %v859
      %873 = vrot.lane.b32.xlu0 %v867, 112
      %v874 = vpop.permute.xlu0 %873
      %875 = vrot.lane.b32.xlu0 %v868, 112
      %v876 = vpop.permute.xlu0 %875
      %877 = vrot.lane.b32.xlu0 %v869, 112
      %v878 = vpop.permute.xlu0 %877
      %v879 = vsel %vm595, %v874, %v876
      %v880 = vsel %vm595, %v876, %v878
      %v883 = vmax.f32 %v864, %v879
      %v884 = vmax.f32 %v865, %v880
      %v885 = vpack.c.bf16 %v883, %v883
      %v886 = vpack.c.bf16 %v884, %v884
      %v887 = vld [vmem:[%s5] sm:$0xf]
      %v888 = vld [vmem:[%s5 + $0x4] sm:$0xf]
      %v889 = vld [vmem:[%s5 + $0x8] sm:$0xf]
      %v890 = vld [vmem:[%s5 + $0xc] sm:$0xf]
      %v891 = vld [vmem:[%s5 + $0x10] sm:$0xf]
      %v892 = vld [vmem:[%s5 + $0x14] sm:$0xf]
      %v893 = vld [vmem:[%s5 + $0x18] sm:$0xf]
      %v894 = vld [vmem:[%s5 + $0x1c] sm:$0xf]
      %v895 = vld [vmem:[%s5 + $0x20] sm:$0xf]
      %v896 = vld [vmem:[%s5 + $0x24] sm:$0xf]
      %v897 = vld [vmem:[%s5 + $0x28] sm:$0xf]
      %v898 = vld [vmem:[%s5 + $0x2c] sm:$0xf]
      %v899 = vld [vmem:[%s5 + $0x30] sm:$0xf]
      %v900 = vld [vmem:[%s5 + $0x34] sm:$0xf]
      %v901 = vld [vmem:[%s5 + $0x38] sm:$0xf]
      %v902 = vld [vmem:[%s5 + $0x3c] sm:$0xf]
      %v903 = vld [vmem:[%s5 + $0x40] sm:$0xf]
      %v904 = vld [vmem:[%s5 + $0x44] sm:$0xf]
      %v905 = vld [vmem:[%s5 + $0x48] sm:$0xf]
      %v906 = vld [vmem:[%s5 + $0x4c] sm:$0xf]
      %v907 = vld [vmem:[%s5 + $0x50] sm:$0xf]
      %v908 = vld [vmem:[%s5 + $0x54] sm:$0xf]
      %v909 = vld [vmem:[%s5 + $0x58] sm:$0xf]
      %v910 = vld [vmem:[%s5 + $0x5c] sm:$0xf]
      %v911 = vld [vmem:[%s5 + $0x60] sm:$0xf]
      %v912 = vld [vmem:[%s5 + $0x64] sm:$0xf]
      %v913 = vld [vmem:[%s5 + $0x68] sm:$0xf]
      %v914 = vld [vmem:[%s5 + $0x6c] sm:$0xf]
      %v915 = vld [vmem:[%s5 + $0x70] sm:$0xf]
      %v916 = vld [vmem:[%s5 + $0x74] sm:$0xf]
      %v917 = vld [vmem:[%s5 + $0x78] sm:$0xf]
      %v918 = vld [vmem:[%s5 + $0x7c] sm:$0xf]
      %v951 = vunpack.c.l.b16 %v887
      %v952 = vunpack.c.l.b16 %v888
      %v953 = vunpack.c.l.b16 %v889
      %v954 = vunpack.c.l.b16 %v890
      %v955 = vunpack.c.l.b16 %v891
      %v956 = vunpack.c.l.b16 %v892
      %v957 = vunpack.c.l.b16 %v893
      %v958 = vunpack.c.l.b16 %v894
      %v959 = vunpack.c.l.b16 %v895
      %v960 = vunpack.c.l.b16 %v896
      %v961 = vunpack.c.l.b16 %v897
      %v962 = vunpack.c.l.b16 %v898
      %v963 = vunpack.c.l.b16 %v899
      %v964 = vunpack.c.l.b16 %v900
      %v965 = vunpack.c.l.b16 %v901
      %v966 = vunpack.c.l.b16 %v902
      %v967 = vunpack.c.l.b16 %v903
      %v968 = vunpack.c.l.b16 %v904
      %v969 = vunpack.c.l.b16 %v905
      %v970 = vunpack.c.l.b16 %v906
      %v971 = vunpack.c.l.b16 %v907
      %v972 = vunpack.c.l.b16 %v908
      %v973 = vunpack.c.l.b16 %v909
      %v974 = vunpack.c.l.b16 %v910
      %v975 = vunpack.c.l.b16 %v911
      %v976 = vunpack.c.l.b16 %v912
      %v977 = vunpack.c.l.b16 %v913
      %v978 = vunpack.c.l.b16 %v914
      %v979 = vunpack.c.l.b16 %v915
      %v980 = vunpack.c.l.b16 %v916
      %v981 = vunpack.c.l.b16 %v917
      %v982 = vunpack.c.l.b16 %v918
      %v983 = vpack.c.b16 %v952, %v951
      %v984 = vpack.c.b16 %v954, %v953
      %v985 = vpack.c.b16 %v956, %v955
      %v986 = vpack.c.b16 %v958, %v957
      %v987 = vpack.c.b16 %v960, %v959
      %v988 = vpack.c.b16 %v962, %v961
      %v989 = vpack.c.b16 %v964, %v963
      %v990 = vpack.c.b16 %v966, %v965
      %v991 = vpack.c.b16 %v968, %v967
      %v992 = vpack.c.b16 %v970, %v969
      %v993 = vpack.c.b16 %v972, %v971
      %v994 = vpack.c.b16 %v974, %v973
      %v995 = vpack.c.b16 %v976, %v975
      %v996 = vpack.c.b16 %v978, %v977
      %v997 = vpack.c.b16 %v980, %v979
      %v998 = vpack.c.b16 %v982, %v981
      %1015 = vmatprep.subr.bf16.mxu0 0
      %1016 = vmatpush1.bf16.msra.mxu0 %v990
      %1017 = vmatprep.subr.bf16.mxu0 0
      %1018 = vmatpush1.bf16.msra.mxu0 %v989
      %1019 = vmatprep.subr.bf16.mxu0 0
      %1020 = vmatpush1.bf16.msra.mxu0 %v988
      %1021 = vmatprep.subr.bf16.mxu0 0
      %1022 = vmatpush1.bf16.msra.mxu0 %v987
      %1023 = vmatprep.subr.bf16.mxu0 0
      %1024 = vmatpush1.bf16.msra.mxu0 %v986
      %1025 = vmatprep.subr.bf16.mxu0 0
      %1026 = vmatpush1.bf16.msra.mxu0 %v985
      %1027 = vmatprep.subr.bf16.mxu0 0
      %1028 = vmatpush1.bf16.msra.mxu0 %v984
      %1029 = vmatprep.subr.bf16.mxu0 0
      %1030 = vmatpush1.bf16.msra.mxu0 %v983
      %1031 = vmatprep.subr.bf16.mxu0 0
      %1032 = vmatpush2.bf16.msra.mxu0 %v998
      %1033 = vmatprep.subr.bf16.mxu0 0
      %1034 = vmatpush2.bf16.msra.mxu0 %v997
      %1035 = vmatprep.subr.bf16.mxu0 0
      %1036 = vmatpush2.bf16.msra.mxu0 %v996
      %1037 = vmatprep.subr.bf16.mxu0 0
      %1038 = vmatpush2.bf16.msra.mxu0 %v995
      %1039 = vmatprep.subr.bf16.mxu0 0
      %1040 = vmatpush2.bf16.msra.mxu0 %v994
      %1041 = vmatprep.subr.bf16.mxu0 0
      %1042 = vmatpush2.bf16.msra.mxu0 %v993
      %1043 = vmatprep.subr.bf16.mxu0 0
      %1044 = vmatpush2.bf16.msra.mxu0 %v992
      %1045 = vmatprep.subr.bf16.mxu0 0
      %1046 = vmatpush2.bf16.msra.mxu0 %v991
      %1047 = vmatprep.mubr.bf16.mxu0 %v886
      %1048 = vmatmul.mubr.bf16.gmra.mxu0 %v885
      %v1049 = vpop.f32.mrf.mxu0
      %v1050 = vadd.f32 0.0, %v1049
      %v1051 = vpop.f32.mrf.mxu0
      %v1052 = vpop.f32.mrf.mxu0
      %v1053 = vpop.f32.mrf.mxu0
      %1054 = vdwg.mxu0
      %1055 = vst.msk [vmem:[#allocation5 + $0x8] sm:$0xff] %vm464, %v1050
      %vm1056 = vcmp.gt.s32.totalorder %v471, 0
      %vm1057 = vcmp.lt.s32.totalorder %v471, 7
      %v1058 = vld [vmem:[#allocation5] sm:$0xff]
      %v1059 = vld [vmem:[#allocation5 + $0x8] sm:$0xff]
      %v1060 = vsel %vm1056, 1, 0
      %vm1061 = vcmp.eq.s32.totalorder %v1060, 1
      %1064 = vrot.lane.b32.xlu0 %v1058, 9
      %v1065 = vpop.permute.xlu0 %1064
      %1066 = vrot.lane.b32.xlu0 %v1059, 9
      %v1067 = vpop.permute.xlu0 %1066
      %vm1068 = vcmask 72704
      %v1069 = vsel %vm1068, %v1065, %v1067
      %v1071 = vsel %vm1061, %v1069, 0.0
      %v1072 = vsel %vm1057, 1, 0
      %vm1073 = vcmp.eq.s32.totalorder %v1072, 1
      %1074 = vrot.lane.b32.xlu0 %v1058, 7
      %v1075 = vpop.permute.xlu0 %1074
      %1076 = vrot.lane.b32.xlu0 %v1059, 7
      %v1077 = vpop.permute.xlu0 %1076
      %vm1078 = vcmask 56320
      %v1079 = vsel %vm1078, %v1075, %v1077
      %v1081 = vsel %vm1073, %v1079, 0.0
      %1082 = vrot.lane.b32.xlu0 %v1058, 1
      %v1083 = vpop.permute.xlu0 %1082
      %1084 = vrot.lane.b32.xlu0 %v1059, 1
      %v1085 = vpop.permute.xlu0 %1084
      %v1086 = vsel %vm526, %v1083, %v1085
      %v1088 = vsel %vm1061, %v1086, 0.0
      %1089 = vrot.lane.b32.xlu0 %v1059, 127
      %v1090 = vpop.permute.xlu0 %1089
      %v1092 = vsel %vm1073, %v1090, 0.0
      %1093 = vrot.lane.b32.xlu0 %v1059, 121
      %v1094 = vpop.permute.xlu0 %1093
      %v1096 = vsel %vm1061, %v1094, 0.0
      %1097 = vrot.lane.b32.xlu0 %v1059, 119
      %v1098 = vpop.permute.xlu0 %1097
      %v1100 = vsel %vm1073, %v1098, 0.0
      %1101 = vrot.lane.b32.xlu0 %v1058, 8
      %v1102 = vpop.permute.xlu0 %1101
      %1103 = vrot.lane.b32.xlu0 %v1059, 8
      %v1104 = vpop.permute.xlu0 %1103
      %vm1105 = vcmask 64512
      %v1106 = vsel %vm1105, %v1102, %v1104
      %1108 = vrot.lane.b32.xlu0 %v1059, 120
      %v1109 = vpop.permute.xlu0 %1108
      %v1111 = vpack.c.bf16 %v1106, %v1071
      %v1112 = vpack.c.bf16 %v1088, %v1081
      %v1113 = vpack.c.bf16 %v1092, %v1059
      %v1114 = vpack.c.bf16 %v1109, %v1096
      %v1115 = vpack.c.bf16 %v1100, %v1100
      %v1116 = vld [vmem:[%s6] sm:$0xf]
      %v1117 = vld [vmem:[%s6 + $0x4] sm:$0xf]
      %v1118 = vld [vmem:[%s7] sm:$0xff]
      %v1119 = vld [vmem:[%s7 + $0x8] sm:$0xff]
      %1121 = vset.pattern.permute.xlu0 0
      %1122 = vperm.xlu0 %1121, %v1118
      %v1123 = vpop.permute.xlu0 %1122
      %1126 = vset.pattern.permute.xlu0 0
      %1127 = vperm.xlu0 %1126, %v1119
      %v1128 = vpop.permute.xlu0 %1127
      %v1132 = vunpack.c.l.b16 %v1116
      %v1133 = vunpack.c.l.b16 %v1117
      %v1134 = vpack.c.b16 %v1133, %v1132
      %v1136 = vsel %vm617, %v1134, 0
      %v1139 = vsel %vm621, %v1115, 0
      %1141 = vmatprep.subr.bf16.mxu0 0
      %1142 = vmatpush1.bf16.msra.mxu0 0
      %1143 = vmatprep.subr.bf16.mxu0 0
      %1144 = vmatpush1.bf16.msra.mxu0 0
      %1145 = vmatprep.subr.bf16.mxu0 0
      %1146 = vmatpush1.bf16.msra.mxu0 0
      %1147 = vmatprep.subr.bf16.mxu0 0
      %1148 = vmatpush1.bf16.msra.mxu0 %v1139
      %1149 = vmatprep.subr.bf16.mxu0 0
      %1150 = vmatpush1.bf16.msra.mxu0 %v1114
      %1151 = vmatprep.subr.bf16.mxu0 0
      %1152 = vmatpush1.bf16.msra.mxu0 %v1113
      %1153 = vmatprep.subr.bf16.mxu0 0
      %1154 = vmatpush1.bf16.msra.mxu0 %v1112
      %1155 = vmatprep.subr.bf16.mxu0 0
      %1156 = vmatpush1.bf16.msra.mxu0 %v1111
      %1157 = vmatprep.subr.bf16.mxu0 0
      %1158 = vmatpush2.bf16.msra.mxu0 0
      %1159 = vmatprep.subr.bf16.mxu0 0
      %1160 = vmatpush2.bf16.msra.mxu0 0
      %1161 = vmatprep.subr.bf16.mxu0 0
      %1162 = vmatpush2.bf16.msra.mxu0 0
      %1163 = vmatprep.subr.bf16.mxu0 0
      %1164 = vmatpush2.bf16.msra.mxu0 0
      %1165 = vmatprep.subr.bf16.mxu0 0
      %1166 = vmatpush2.bf16.msra.mxu0 0
      %1167 = vmatprep.subr.bf16.mxu0 0
      %1168 = vmatpush2.bf16.msra.mxu0 0
      %1169 = vmatprep.subr.bf16.mxu0 0
      %1170 = vmatpush2.bf16.msra.mxu0 0
      %1171 = vmatprep.subr.bf16.mxu0 0
      %1172 = vmatpush2.bf16.msra.mxu0 0
      %1173 = vmatprep.mubr.bf16.mxu0 0
      %1174 = vmatmul.mubr.bf16.gmra.mxu0 %v1136
      %v1175 = vpop.f32.mrf.mxu0
      %v1176 = vadd.f32 %v1123, %v1175
      %v1177 = vpop.f32.mrf.mxu0
      %v1178 = vpop.f32.mrf.mxu0
      %v1179 = vadd.f32 %v1128, %v1178
      %v1180 = vpop.f32.mrf.mxu0
      %1181 = vdwg.mxu0
      %v1182 = vmax.f32 %v1176, 0.0
      %v1183 = vmax.f32 %v1179, 0.0
      %v1184 = vpack.c.bf16 %v1183, %v1182
      %v1185 = vld [vmem:[%s8] sm:$0xff]
      %v1186 = vld [vmem:[%s8 + $0x8] sm:$0xff]
      %v1187 = vld [vmem:[%s8 + $0x10] sm:$0xff]
      %v1188 = vld [vmem:[%s8 + $0x18] sm:$0xff]
      %v1189 = vld [vmem:[%s8 + $0x20] sm:$0xff]
      %v1190 = vld [vmem:[%s8 + $0x28] sm:$0xff]
      %v1191 = vld [vmem:[%s8 + $0x30] sm:$0xff]
      %v1192 = vld [vmem:[%s8 + $0x38] sm:$0xff]
      %v1201 = vunpack.c.l.b16 %v1185
      %v1202 = vunpack.c.h.b16 %v1185
      %v1203 = vunpack.c.l.b16 %v1186
      %v1204 = vunpack.c.h.b16 %v1186
      %v1205 = vunpack.c.l.b16 %v1187
      %v1206 = vunpack.c.h.b16 %v1187
      %v1207 = vunpack.c.l.b16 %v1188
      %v1208 = vunpack.c.h.b16 %v1188
      %v1209 = vunpack.c.l.b16 %v1189
      %v1210 = vunpack.c.h.b16 %v1189
      %v1211 = vunpack.c.l.b16 %v1190
      %v1212 = vunpack.c.h.b16 %v1190
      %v1213 = vunpack.c.l.b16 %v1191
      %v1214 = vunpack.c.h.b16 %v1191
      %v1215 = vunpack.c.l.b16 %v1192
      %v1216 = vunpack.c.h.b16 %v1192
      %v1217 = vpack.c.b16 %v1203, %v1201
      %v1218 = vpack.c.b16 %v1204, %v1202
      %v1219 = vpack.c.b16 %v1207, %v1205
      %v1220 = vpack.c.b16 %v1208, %v1206
      %v1221 = vpack.c.b16 %v1211, %v1209
      %v1222 = vpack.c.b16 %v1212, %v1210
      %v1223 = vpack.c.b16 %v1215, %v1213
      %v1224 = vpack.c.b16 %v1216, %v1214
      %v1234 = vsel %vm464, %v1184, 0
      %1236 = vmatprep.subr.bf16.mxu0 0
      %1237 = vmatpush1.bf16.msra.mxu0 0
      %1238 = vmatprep.subr.bf16.mxu0 0
      %1239 = vmatpush1.bf16.msra.mxu0 0
      %1240 = vmatprep.subr.bf16.mxu0 0
      %1241 = vmatpush1.bf16.msra.mxu0 0
      %1242 = vmatprep.subr.bf16.mxu0 0
      %1243 = vmatpush1.bf16.msra.mxu0 0
      %1244 = vmatprep.subr.bf16.mxu0 %v1224
      %1245 = vmatpush1.bf16.msra.mxu0 %v1223
      %1246 = vmatprep.subr.bf16.mxu0 %v1222
      %1247 = vmatpush1.bf16.msra.mxu0 %v1221
      %1248 = vmatprep.subr.bf16.mxu0 %v1220
      %1249 = vmatpush1.bf16.msra.mxu0 %v1219
      %1250 = vmatprep.subr.bf16.mxu0 %v1218
      %1251 = vmatpush1.bf16.msra.mxu0 %v1217
      %1252 = vmatprep.subr.bf16.mxu0 0
      %1253 = vmatpush2.bf16.msra.mxu0 0
      %1254 = vmatprep.subr.bf16.mxu0 0
      %1255 = vmatpush2.bf16.msra.mxu0 0
      %1256 = vmatprep.subr.bf16.mxu0 0
      %1257 = vmatpush2.bf16.msra.mxu0 0
      %1258 = vmatprep.subr.bf16.mxu0 0
      %1259 = vmatpush2.bf16.msra.mxu0 0
      %1260 = vmatprep.subr.bf16.mxu0 0
      %1261 = vmatpush2.bf16.msra.mxu0 0
      %1262 = vmatprep.subr.bf16.mxu0 0
      %1263 = vmatpush2.bf16.msra.mxu0 0
      %1264 = vmatprep.subr.bf16.mxu0 0
      %1265 = vmatpush2.bf16.msra.mxu0 0
      %1266 = vmatprep.subr.bf16.mxu0 0
      %1267 = vmatpush2.bf16.msra.mxu0 0
      %1268 = vmatprep.mubr.bf16.mxu0 0
      %1269 = vmatmul.mubr.bf16.gmra.mxu0 %v1234
      %v1270 = vpop.f32.mrf.mxu0
      %v1271 = vadd.f32 0.0, %v1270
      %v1272 = vpop.f32.mrf.mxu0
      %v1273 = vadd.f32 0.0, %v1272
      %v1274 = vpop.f32.mrf.mxu0
      %v1275 = vadd.f32 0.0, %v1274
      %v1276 = vpop.f32.mrf.mxu0
      %v1277 = vadd.f32 0.0, %v1276
      %1278 = vdwg.mxu0
      %1279 = vst [vmem:[#allocation4 + $0x8] sm:$0xff] %v1271
      %1280 = vst [vmem:[#allocation4 + $0x10] sm:$0xff] %v1273
      %1281 = vst [vmem:[#allocation4 + $0x28] sm:$0xff] %v1275
      %1282 = vst [vmem:[#allocation4 + $0x30] sm:$0xff] %v1277
      %v1283 = vld [vmem:[#allocation4] sm:$0xff]
      %v1284 = vld [vmem:[#allocation4 + $0x8] sm:$0xff]
      %v1285 = vld [vmem:[#allocation4 + $0x10] sm:$0xff]
      %v1286 = vld [vmem:[#allocation4 + $0x20] sm:$0xff]
      %v1287 = vld [vmem:[#allocation4 + $0x28] sm:$0xff]
      %v1288 = vld [vmem:[#allocation4 + $0x30] sm:$0xff]
      %v1289 = vld [vmem:[#allocation4 + $0x40] sm:$0xff]
      %v1290 = vld [vmem:[#allocation4 + $0x48] sm:$0xff]
      %v1291 = vld [vmem:[#allocation4 + $0x50] sm:$0xff]
      %1301 = vrot.lane.b32.xlu0 %v1283, 17
      %v1302 = vpop.permute.xlu0 %1301
      %1303 = vrot.lane.b32.xlu0 %v1284, 17
      %v1304 = vpop.permute.xlu0 %1303
      %1305 = vrot.lane.b32.xlu0 %v1285, 17
      %v1306 = vpop.permute.xlu0 %1305
      %1307 = vrot.lane.b32.xlu0 %v1286, 17
      %v1308 = vpop.permute.xlu0 %1307
      %1309 = vrot.lane.b32.xlu0 %v1287, 17
      %v1310 = vpop.permute.xlu0 %1309
      %1311 = vrot.lane.b32.xlu0 %v1288, 17
      %v1312 = vpop.permute.xlu0 %1311
      %1313 = vrot.lane.b32.xlu0 %v1289, 17
      %v1314 = vpop.permute.xlu0 %1313
      %1315 = vrot.lane.b32.xlu0 %v1290, 17
      %v1316 = vpop.permute.xlu0 %1315
      %1317 = vrot.lane.b32.xlu0 %v1291, 17
      %v1318 = vpop.permute.xlu0 %1317
      %v1319 = vsel %vm496, %v1302, %v1304
      %v1320 = vsel %vm496, %v1304, %v1306
      %v1321 = vsel %vm496, %v1308, %v1310
      %v1322 = vsel %vm496, %v1310, %v1312
      %v1323 = vsel %vm496, %v1314, %v1316
      %v1324 = vsel %vm496, %v1316, %v1318
      %v1331 = vsel %vm485, %v1319, 0.0
      %v1332 = vsel %vm486, %v1320, 0.0
      %v1333 = vsel %vm485, %v1321, 0.0
      %v1334 = vsel %vm486, %v1322, 0.0
      %v1335 = vsel %vm485, %v1323, 0.0
      %v1336 = vsel %vm486, %v1324, 0.0
      %1337 = vrot.lane.b32.xlu0 %v1283, 15
      %v1338 = vpop.permute.xlu0 %1337
      %1339 = vrot.lane.b32.xlu0 %v1284, 15
      %v1340 = vpop.permute.xlu0 %1339
      %1341 = vrot.lane.b32.xlu0 %v1285, 15
      %v1342 = vpop.permute.xlu0 %1341
      %1343 = vrot.lane.b32.xlu0 %v1286, 15
      %v1344 = vpop.permute.xlu0 %1343
      %1345 = vrot.lane.b32.xlu0 %v1287, 15
      %v1346 = vpop.permute.xlu0 %1345
      %1347 = vrot.lane.b32.xlu0 %v1288, 15
      %v1348 = vpop.permute.xlu0 %1347
      %1349 = vrot.lane.b32.xlu0 %v1289, 15
      %v1350 = vpop.permute.xlu0 %1349
      %1351 = vrot.lane.b32.xlu0 %v1290, 15
      %v1352 = vpop.permute.xlu0 %1351
      %1353 = vrot.lane.b32.xlu0 %v1291, 15
      %v1354 = vpop.permute.xlu0 %1353
      %v1355 = vsel %vm513, %v1338, %v1340
      %v1356 = vsel %vm513, %v1340, %v1342
      %v1357 = vsel %vm513, %v1344, %v1346
      %v1358 = vsel %vm513, %v1346, %v1348
      %v1359 = vsel %vm513, %v1350, %v1352
      %v1360 = vsel %vm513, %v1352, %v1354
      %v1367 = vsel %vm505, %v1355, 0.0
      %v1368 = vsel %vm506, %v1356, 0.0
      %v1369 = vsel %vm505, %v1357, 0.0
      %v1370 = vsel %vm506, %v1358, 0.0
      %v1371 = vsel %vm505, %v1359, 0.0
      %v1372 = vsel %vm506, %v1360, 0.0
      %1373 = vrot.lane.b32.xlu0 %v1283, 1
      %v1374 = vpop.permute.xlu0 %1373
      %1375 = vrot.lane.b32.xlu0 %v1284, 1
      %v1376 = vpop.permute.xlu0 %1375
      %1377 = vrot.lane.b32.xlu0 %v1285, 1
      %v1378 = vpop.permute.xlu0 %1377
      %1379 = vrot.lane.b32.xlu0 %v1286, 1
      %v1380 = vpop.permute.xlu0 %1379
      %1381 = vrot.lane.b32.xlu0 %v1287, 1
      %v1382 = vpop.permute.xlu0 %1381
      %1383 = vrot.lane.b32.xlu0 %v1288, 1
      %v1384 = vpop.permute.xlu0 %1383
      %1385 = vrot.lane.b32.xlu0 %v1289, 1
      %v1386 = vpop.permute.xlu0 %1385
      %1387 = vrot.lane.b32.xlu0 %v1290, 1
      %v1388 = vpop.permute.xlu0 %1387
      %1389 = vrot.lane.b32.xlu0 %v1291, 1
      %v1390 = vpop.permute.xlu0 %1389
      %v1391 = vsel %vm526, %v1374, %v1376
      %v1392 = vsel %vm526, %v1376, %v1378
      %v1393 = vsel %vm526, %v1380, %v1382
      %v1394 = vsel %vm526, %v1382, %v1384
      %v1395 = vsel %vm526, %v1386, %v1388
      %v1396 = vsel %vm526, %v1388, %v1390
      %v1403 = vsel %vm485, %v1391, 0.0
      %v1404 = vsel %vm486, %v1392, 0.0
      %v1405 = vsel %vm485, %v1393, 0.0
      %v1406 = vsel %vm486, %v1394, 0.0
      %v1407 = vsel %vm485, %v1395, 0.0
      %v1408 = vsel %vm486, %v1396, 0.0
      %v1409 = vld [vmem:[#allocation4 + $0x8] sm:$0xff]
      %v1410 = vld [vmem:[#allocation4 + $0x10] sm:$0xff]
      %v1411 = vld [vmem:[#allocation4 + $0x18] sm:$0xff]
      %v1412 = vld [vmem:[#allocation4 + $0x28] sm:$0xff]
      %v1413 = vld [vmem:[#allocation4 + $0x30] sm:$0xff]
      %v1414 = vld [vmem:[#allocation4 + $0x38] sm:$0xff]
      %v1415 = vld [vmem:[#allocation4 + $0x48] sm:$0xff]
      %v1416 = vld [vmem:[#allocation4 + $0x50] sm:$0xff]
      %v1417 = vld [vmem:[#allocation4 + $0x58] sm:$0xff]
      %1427 = vrot.lane.b32.xlu0 %v1409, 127
      %v1428 = vpop.permute.xlu0 %1427
      %1429 = vrot.lane.b32.xlu0 %v1410, 127
      %v1430 = vpop.permute.xlu0 %1429
      %1431 = vrot.lane.b32.xlu0 %v1411, 127
      %v1432 = vpop.permute.xlu0 %1431
      %1433 = vrot.lane.b32.xlu0 %v1412, 127
      %v1434 = vpop.permute.xlu0 %1433
      %1435 = vrot.lane.b32.xlu0 %v1413, 127
      %v1436 = vpop.permute.xlu0 %1435
      %1437 = vrot.lane.b32.xlu0 %v1414, 127
      %v1438 = vpop.permute.xlu0 %1437
      %1439 = vrot.lane.b32.xlu0 %v1415, 127
      %v1440 = vpop.permute.xlu0 %1439
      %1441 = vrot.lane.b32.xlu0 %v1416, 127
      %v1442 = vpop.permute.xlu0 %1441
      %1443 = vrot.lane.b32.xlu0 %v1417, 127
      %v1444 = vpop.permute.xlu0 %1443
      %v1445 = vsel %vm545, %v1428, %v1430
      %v1446 = vsel %vm545, %v1430, %v1432
      %v1447 = vsel %vm545, %v1434, %v1436
      %v1448 = vsel %vm545, %v1436, %v1438
      %v1449 = vsel %vm545, %v1440, %v1442
      %v1450 = vsel %vm545, %v1442, %v1444
      %v1457 = vsel %vm505, %v1445, 0.0
      %v1458 = vsel %vm506, %v1446, 0.0
      %v1459 = vsel %vm505, %v1447, 0.0
      %v1460 = vsel %vm506, %v1448, 0.0
      %v1461 = vsel %vm505, %v1449, 0.0
      %v1462 = vsel %vm506, %v1450, 0.0
      %1463 = vrot.lane.b32.xlu0 %v1409, 113
      %v1464 = vpop.permute.xlu0 %1463
      %1465 = vrot.lane.b32.xlu0 %v1410, 113
      %v1466 = vpop.permute.xlu0 %1465
      %1467 = vrot.lane.b32.xlu0 %v1411, 113
      %v1468 = vpop.permute.xlu0 %1467
      %1469 = vrot.lane.b32.xlu0 %v1412, 113
      %v1470 = vpop.permute.xlu0 %1469
      %1471 = vrot.lane.b32.xlu0 %v1413, 113
      %v1472 = vpop.permute.xlu0 %1471
      %1473 = vrot.lane.b32.xlu0 %v1414, 113
      %v1474 = vpop.permute.xlu0 %1473
      %1475 = vrot.lane.b32.xlu0 %v1415, 113
      %v1476 = vpop.permute.xlu0 %1475
      %1477 = vrot.lane.b32.xlu0 %v1416, 113
      %v1478 = vpop.permute.xlu0 %1477
      %1479 = vrot.lane.b32.xlu0 %v1417, 113
      %v1480 = vpop.permute.xlu0 %1479
      %v1481 = vsel %vm558, %v1464, %v1466
      %v1482 = vsel %vm558, %v1466, %v1468
      %v1483 = vsel %vm558, %v1470, %v1472
      %v1484 = vsel %vm558, %v1472, %v1474
      %v1485 = vsel %vm558, %v1476, %v1478
      %v1486 = vsel %vm558, %v1478, %v1480
      %v1493 = vsel %vm485, %v1481, 0.0
      %v1494 = vsel %vm486, %v1482, 0.0
      %v1495 = vsel %vm485, %v1483, 0.0
      %v1496 = vsel %vm486, %v1484, 0.0
      %v1497 = vsel %vm485, %v1485, 0.0
      %v1498 = vsel %vm486, %v1486, 0.0
      %1499 = vrot.lane.b32.xlu0 %v1409, 111
      %v1500 = vpop.permute.xlu0 %1499
      %1501 = vrot.lane.b32.xlu0 %v1410, 111
      %v1502 = vpop.permute.xlu0 %1501
      %1503 = vrot.lane.b32.xlu0 %v1411, 111
      %v1504 = vpop.permute.xlu0 %1503
      %1505 = vrot.lane.b32.xlu0 %v1412, 111
      %v1506 = vpop.permute.xlu0 %1505
      %1507 = vrot.lane.b32.xlu0 %v1413, 111
      %v1508 = vpop.permute.xlu0 %1507
      %1509 = vrot.lane.b32.xlu0 %v1414, 111
      %v1510 = vpop.permute.xlu0 %1509
      %1511 = vrot.lane.b32.xlu0 %v1415, 111
      %v1512 = vpop.permute.xlu0 %1511
      %1513 = vrot.lane.b32.xlu0 %v1416, 111
      %v1514 = vpop.permute.xlu0 %1513
      %1515 = vrot.lane.b32.xlu0 %v1417, 111
      %v1516 = vpop.permute.xlu0 %1515
      %v1517 = vsel %vm571, %v1500, %v1502
      %v1518 = vsel %vm571, %v1502, %v1504
      %v1519 = vsel %vm571, %v1506, %v1508
      %v1520 = vsel %vm571, %v1508, %v1510
      %v1521 = vsel %vm571, %v1512, %v1514
      %v1522 = vsel %vm571, %v1514, %v1516
      %v1529 = vsel %vm505, %v1517, 0.0
      %v1530 = vsel %vm506, %v1518, 0.0
      %v1531 = vsel %vm505, %v1519, 0.0
      %v1532 = vsel %vm506, %v1520, 0.0
      %v1533 = vsel %vm505, %v1521, 0.0
      %v1534 = vsel %vm506, %v1522, 0.0
      %1535 = vrot.lane.b32.xlu0 %v1283, 16
      %v1536 = vpop.permute.xlu0 %1535
      %1537 = vrot.lane.b32.xlu0 %v1284, 16
      %v1538 = vpop.permute.xlu0 %1537
      %1539 = vrot.lane.b32.xlu0 %v1285, 16
      %v1540 = vpop.permute.xlu0 %1539
      %1541 = vrot.lane.b32.xlu0 %v1286, 16
      %v1542 = vpop.permute.xlu0 %1541
      %1543 = vrot.lane.b32.xlu0 %v1287, 16
      %v1544 = vpop.permute.xlu0 %1543
      %1545 = vrot.lane.b32.xlu0 %v1288, 16
      %v1546 = vpop.permute.xlu0 %1545
      %1547 = vrot.lane.b32.xlu0 %v1289, 16
      %v1548 = vpop.permute.xlu0 %1547
      %1549 = vrot.lane.b32.xlu0 %v1290, 16
      %v1550 = vpop.permute.xlu0 %1549
      %1551 = vrot.lane.b32.xlu0 %v1291, 16
      %v1552 = vpop.permute.xlu0 %1551
      %v1553 = vsel %vm584, %v1536, %v1538
      %v1554 = vsel %vm584, %v1538, %v1540
      %v1555 = vsel %vm584, %v1542, %v1544
      %v1556 = vsel %vm584, %v1544, %v1546
      %v1557 = vsel %vm584, %v1548, %v1550
      %v1558 = vsel %vm584, %v1550, %v1552
      %1565 = vrot.lane.b32.xlu0 %v1409, 112
      %v1566 = vpop.permute.xlu0 %1565
      %1567 = vrot.lane.b32.xlu0 %v1410, 112
      %v1568 = vpop.permute.xlu0 %1567
      %1569 = vrot.lane.b32.xlu0 %v1411, 112
      %v1570 = vpop.permute.xlu0 %1569
      %1571 = vrot.lane.b32.xlu0 %v1412, 112
      %v1572 = vpop.permute.xlu0 %1571
      %1573 = vrot.lane.b32.xlu0 %v1413, 112
      %v1574 = vpop.permute.xlu0 %1573
      %1575 = vrot.lane.b32.xlu0 %v1414, 112
      %v1576 = vpop.permute.xlu0 %1575
      %1577 = vrot.lane.b32.xlu0 %v1415, 112
      %v1578 = vpop.permute.xlu0 %1577
      %1579 = vrot.lane.b32.xlu0 %v1416, 112
      %v1580 = vpop.permute.xlu0 %1579
      %1581 = vrot.lane.b32.xlu0 %v1417, 112
      %v1582 = vpop.permute.xlu0 %1581
      %v1583 = vsel %vm595, %v1566, %v1568
      %v1584 = vsel %vm595, %v1568, %v1570
      %v1585 = vsel %vm595, %v1572, %v1574
      %v1586 = vsel %vm595, %v1574, %v1576
      %v1587 = vsel %vm595, %v1578, %v1580
      %v1588 = vsel %vm595, %v1580, %v1582
      %v1595 = vpack.c.bf16 %v1333, %v1331
      %v1596 = vpack.c.bf16 %v1334, %v1332
      %v1597 = vpack.c.bf16 %v1553, %v1335
      %v1598 = vpack.c.bf16 %v1554, %v1336
      %v1599 = vpack.c.bf16 %v1557, %v1555
      %v1600 = vpack.c.bf16 %v1558, %v1556
      %v1601 = vpack.c.bf16 %v1369, %v1367
      %v1602 = vpack.c.bf16 %v1370, %v1368
      %v1603 = vpack.c.bf16 %v1403, %v1371
      %v1604 = vpack.c.bf16 %v1404, %v1372
      %v1605 = vpack.c.bf16 %v1407, %v1405
      %v1606 = vpack.c.bf16 %v1408, %v1406
      %v1607 = vpack.c.bf16 %v1287, %v1284
      %v1608 = vpack.c.bf16 %v1288, %v1285
      %v1609 = vpack.c.bf16 %v1457, %v1290
      %v1610 = vpack.c.bf16 %v1458, %v1291
      %v1611 = vpack.c.bf16 %v1461, %v1459
      %v1612 = vpack.c.bf16 %v1462, %v1460
      %v1613 = vpack.c.bf16 %v1495, %v1493
      %v1614 = vpack.c.bf16 %v1496, %v1494
      %v1615 = vpack.c.bf16 %v1583, %v1497
      %v1616 = vpack.c.bf16 %v1584, %v1498
      %v1617 = vpack.c.bf16 %v1587, %v1585
      %v1618 = vpack.c.bf16 %v1588, %v1586
      %v1619 = vpack.c.bf16 %v1531, %v1529
      %v1620 = vpack.c.bf16 %v1532, %v1530
      %v1621 = vpack.c.bf16 %v1533, %v1533
      %v1622 = vpack.c.bf16 %v1534, %v1534
      %v1623 = vld [vmem:[%s9] sm:$0xff]
      %v1624 = vld [vmem:[%s10] sm:$0xff]
      %1626 = vset.pattern.permute.xlu0 0
      %1627 = vperm.xlu0 %1626, %v1624
      %v1628 = vpop.permute.xlu0 %1627
      %v1631 = vunpack.c.l.b16 %v1623
      %v1632 = vunpack.c.h.b16 %v1623
      %v1633 = vpack.c.b16 %v1631, %v1631
      %v1634 = vpack.c.b16 %v1632, %v1632
      %vm1636 = vcmask 719872
      %v1638 = vsel %vm1636, %v1634, 0
      %v1641 = vsel %vm621, %v1621, 0
      %v1644 = vsel %vm621, %v1622, 0
      %1646 = vmatprep.subr.bf16.mxu0 %v1610
      %1647 = vmatpush1.bf16.msra.mxu0 %v1609
      %1648 = vmatprep.subr.bf16.mxu0 %v1608
      %1649 = vmatpush1.bf16.msra.mxu0 %v1607
      %1650 = vmatprep.subr.bf16.mxu0 %v1606
      %1651 = vmatpush1.bf16.msra.mxu0 %v1605
      %1652 = vmatprep.subr.bf16.mxu0 %v1604
      %1653 = vmatpush1.bf16.msra.mxu0 %v1603
      %1654 = vmatprep.subr.bf16.mxu0 %v1602
      %1655 = vmatpush1.bf16.msra.mxu0 %v1601
      %1656 = vmatprep.subr.bf16.mxu0 %v1600
      %1657 = vmatpush1.bf16.msra.mxu0 %v1599
      %1658 = vmatprep.subr.bf16.mxu0 %v1598
      %1659 = vmatpush1.bf16.msra.mxu0 %v1597
      %1660 = vmatprep.subr.bf16.mxu0 %v1596
      %1661 = vmatpush1.bf16.msra.mxu0 %v1595
      %1662 = vmatprep.subr.bf16.mxu0 0
      %1663 = vmatpush2.bf16.msra.mxu0 0
      %1664 = vmatprep.subr.bf16.mxu0 0
      %1665 = vmatpush2.bf16.msra.mxu0 0
      %1666 = vmatprep.subr.bf16.mxu0 %v1644
      %1667 = vmatpush2.bf16.msra.mxu0 %v1641
      %1668 = vmatprep.subr.bf16.mxu0 %v1620
      %1669 = vmatpush2.bf16.msra.mxu0 %v1619
      %1670 = vmatprep.subr.bf16.mxu0 %v1618
      %1671 = vmatpush2.bf16.msra.mxu0 %v1617
      %1672 = vmatprep.subr.bf16.mxu0 %v1616
      %1673 = vmatpush2.bf16.msra.mxu0 %v1615
      %1674 = vmatprep.subr.bf16.mxu0 %v1614
      %1675 = vmatpush2.bf16.msra.mxu0 %v1613
      %1676 = vmatprep.subr.bf16.mxu0 %v1612
      %1677 = vmatpush2.bf16.msra.mxu0 %v1611
      %1678 = vmatprep.mubr.bf16.mxu0 %v1638
      %1679 = vmatmul.mubr.bf16.gmra.mxu0 %v1633
      %v1680 = vpop.f32.mrf.mxu0
      %v1681 = vadd.f32 %v1628, %v1680
      %v1682 = vpop.f32.mrf.mxu0
      %v1683 = vadd.f32 %v1628, %v1682
      %v1684 = vpop.f32.mrf.mxu0
      %v1685 = vpop.f32.mrf.mxu0
      %1686 = vdwg.mxu0
      %v1687 = vmax.f32 %v1681, 0.0
      %v1688 = vmax.f32 %v1683, 0.0
      %v1689 = vld [vmem:[%s11] sm:$0x1]
      %v1690 = vpack.c.bf16 %v1687, %v1687
      %v1691 = vpack.c.bf16 %v1688, %v1688
      %v1692 = vld [vmem:[#allocation6] sm:$0x1]
      %1694 = vset.pattern.permute.xlu0 0
      %1695 = vperm.xlu0 %1694, %v1692
      %v1696 = vpop.permute.xlu0 %1695
      %v1698 = vlaneseq
      %v1699 = vshrl.u32 %v1698, 7
      %v1700 = vsub.s32 0, %v1699
      %v1701 = vrot.slane %v1696, %v1700
      %v1703 = vsel %vm1105, %v1689, 0
      %v1706 = vsel %vm621, %v1690, 0
      %v1709 = vsel %vm621, %v1691, 0
      %1711 = vmatprep.subr.bf16.mxu0 0
      %1712 = vmatpush1.bf16.msra.mxu0 0
      %1713 = vmatprep.subr.bf16.mxu0 0
      %1714 = vmatpush1.bf16.msra.mxu0 0
      %1715 = vmatprep.subr.bf16.mxu0 0
      %1716 = vmatpush1.bf16.msra.mxu0 0
      %1717 = vmatprep.subr.bf16.mxu0 0
      %1718 = vmatpush1.bf16.msra.mxu0 0
      %1719 = vmatprep.subr.bf16.mxu0 0
      %1720 = vmatpush1.bf16.msra.mxu0 0
      %1721 = vmatprep.subr.bf16.mxu0 0
      %1722 = vmatpush1.bf16.msra.mxu0 0
      %1723 = vmatprep.subr.bf16.mxu0 0
      %1724 = vmatpush1.bf16.msra.mxu0 0
      %1725 = vmatprep.subr.bf16.mxu0 %v1709
      %1726 = vmatpush1.bf16.msra.mxu0 %v1706
      %1727 = vmatprep.subr.bf16.mxu0 0
      %1728 = vmatpush2.bf16.msra.mxu0 0
      %1729 = vmatprep.subr.bf16.mxu0 0
      %1730 = vmatpush2.bf16.msra.mxu0 0
      %1731 = vmatprep.subr.bf16.mxu0 0
      %1732 = vmatpush2.bf16.msra.mxu0 0
      %1733 = vmatprep.subr.bf16.mxu0 0
      %1734 = vmatpush2.bf16.msra.mxu0 0
      %1735 = vmatprep.subr.bf16.mxu0 0
      %1736 = vmatpush2.bf16.msra.mxu0 0
      %1737 = vmatprep.subr.bf16.mxu0 0
      %1738 = vmatpush2.bf16.msra.mxu0 0
      %1739 = vmatprep.subr.bf16.mxu0 0
      %1740 = vmatpush2.bf16.msra.mxu0 0
      %1741 = vmatprep.subr.bf16.mxu0 0
      %1742 = vmatpush2.bf16.msra.mxu0 0
      %1743 = vmatprep.mubr.bf16.mxu0 0
      %1744 = vmatmul.mubr.bf16.gmra.mxu0 %v1703
      %v1745 = vpop.f32.mrf.mxu0
      %v1746 = vadd.f32 %v1701, %v1745
      %v1747 = vpop.f32.mrf.mxu0
      %v1748 = vadd.f32 %v1701, %v1747
      %v1749 = vpop.f32.mrf.mxu0
      %v1750 = vpop.f32.mrf.mxu0
      %1751 = vdwg.mxu0
      %v1752 = vxor.u32 %v1746, 2147483648
      %v1753 = vxor.u32 %v1748, 2147483648
      %v1754 = vmul.f32 %v1752, 1.442695
      %v1755 = vpow.pop %v1754
      %v1756 = vmul.f32 %v1753, 1.442695
      %v1757 = vpow.pop %v1756
      %v1758 = vadd.f32 %v1755, 1.0
      %v1759 = vadd.f32 %v1757, 1.0
      %v1760 = vrcp.pop %v1758
      %v1761 = vmul.f32 1.0, %v1760
      %v1762 = vrcp.pop %v1759
      %v1763 = vmul.f32 1.0, %v1762
      %v1766 = vcombine.low %v1761, %v1763
      %v1768 = vunpack.c.l.s4 1966171168
      %v1769 = vunpack.c.0.s8 %v1768
      %v1770 = vlaneseq
      %v1771 = vshrl.u32 %v1770, 7
      %v1772 = vsub.s32 %v1769, %v1771
      %v1773 = vrot.slane %v1766, %v1772
      %v1775 = vunpack.c.l.s4 1966171168
      %v1776 = vunpack.c.0.s8 %v1775
      %v1777 = vlaneseq
      %v1778 = vshrl.u32 %v1777, 7
      %v1779 = vsub.s32 %v1776, %v1778
      %v1780 = vrot.slane %v1773, %v1779
      %v1782 = vlaneseq
      %vm1783 = vcmp.ge.s32.totalorder %v1782, 0
      %vm1784 = vcmp.lt.s32.totalorder %v1782, 256
      %vm1785 = vmand %vm1783, %vm1784
      %1786 = vst.msk [vmem:[%s440] sm:$0x3] %vm1785, %v1780
      %p1787 = scmp.lt.s32.totalorder %s26, 1
      %s1788 = scalar_select %p1787, %s26, 1
      %s1789 = smul.addr %s1788, 2
      %s1790 = scalar_lea.vmem %s13, %s1789
      // Predicated region
      $region73: #{layout_segmentation_forward.1} parent=71 // pred_check
        %p1791 = pneg %p322
      $region74: #{layout_segmentation_forward.1} parent=71 // pred_check_branch
        %1793 = sbr.rel (%p1791) target = $region76
      $region75: #{layout_segmentation_forward.1} parent=71 // pred_region
        _
      $region76: #{layout_segmentation_forward.1} parent=71 // pred_fallthru
        _
    $region72: #{layout_segmentation_forward.1} parent=5 // pred_fallthru
      _
    %p1794 = scmp.le.s32.totalorder 2, %s21
    // Predicated region
    $region77: #{layout_segmentation_forward.1} parent=5 // pred_check
      %p1795 = pneg %p1794
    $region78: #{layout_segmentation_forward.1} parent=5 // pred_check_branch
      %1797 = sbr.rel (%p1795) target = $region80
    $region79: #{layout_segmentation_forward.1} parent=5 // pred_region
      %s1798 = ssub.s32 %s21, 2
      // Predicated region
      $region81: #{layout_segmentation_forward.1} parent=79 // pred_check
        %p1799 = pneg %p328
      $region82: #{layout_segmentation_forward.1} parent=79 // pred_check_branch
        %1801 = sbr.rel (%p1799) target = $region84
      $region83: #{layout_segmentation_forward.1} parent=79 // pred_region
        %p1802 = scmp.lt.s32.totalorder %s27, 1
        %s1803 = scalar_select %p1802, %s27, 1
        %s1804 = smul.addr %s1803, 2
        %s1805 = scalar_lea.vmem %s13, %s1804
      $region84: #{layout_segmentation_forward.1} parent=79 // pred_fallthru
        _
    $region80: #{layout_segmentation_forward.1} parent=5 // pred_fallthru
      _
  $region6: #{layout_segmentation_forward.1} parent=0 // loop_footer
    %s25 = sadd.s32 1, %s21
  $region7: #{layout_segmentation_forward.1} parent=0 // loop_footer_branch
    %20 = sbr.rel target = $region3
  $region8: #{layout_segmentation_forward.1} parent=0 // loop_exit
    _

</llo_original>
